<compile_context>
chip_gen: v7x
topology: tpu7x:2x2x1
jax: 0.10.0
libtpu: 0.0.40
codegen_flags: <defaults>
</compile_context>

<pallas_src>
import functools
from math import gcd

import jax
import jax.numpy as jnp
import numpy as np
from jax.experimental import pallas as pl
from jax.experimental.pallas import tpu as pltpu


def _round_up(a, b):
    return ((a + b - 1) // b) * b


def _lcm(a, b):
    return a * b // gcd(a, b)


# ---------------------------------------------------------------------------
# Kernel
# ---------------------------------------------------------------------------
def _lsa_kernel(x_ref, w_ref, wo_ref, b_ref, bo_ref, segt_ref, o_ref, *, C8):
    # x_ref:    (1, C, TM)       TM = TPB * N lanes (TPB pixels, N patches each)
    # w_ref:    (R, C)  bf16     R = 8 + 2*C8, fused [q(pad 8); k(pad C8); v(pad C8)]
    # wo_ref:   (C, C8) bf16     out-projection, columns padded to C8
    # b_ref:    (R, 1)  f32      fused bias stack
    # bo_ref:   (C, 1)  f32
    # segt_ref: (TPB, TM) f32    one-hot pixel -> lane map (also the softmax mask)
    # o_ref:    (1, C, TM)
    x = x_ref[0].astype(jnp.bfloat16)                      # cast slab once for the MXU
    segt = segt_ref[...]                                   # (TPB, TM) f32, exact 0/1

    # Fused 1x1 qkv conv == ONE matmul over channels (bf16 operands, f32 acc).
    qkv = jnp.dot(w_ref[...], x, preferred_element_type=jnp.float32) + b_ref[...]   # (R, TM)
    q = qkv[0:1]                                           # (1, TM)
    k = qkv[8:8 + C8]                                      # (C8, TM)  pad rows are exactly 0
    v = qkv[8 + C8:8 + 2 * C8]                             # (C8, TM)  pad rows are exactly 0

    # Per-pixel softmax over the N patches of each pixel (contiguous lane
    # segments of length N), with a per-pixel max for numerical stability.
    on_seg = segt > 0.5                                    # (TPB, TM) bool
    masked = jnp.where(on_seg, q, jnp.float32(-1e30))      # row p = q restricted to pixel p
    m_p = jnp.max(masked, axis=1, keepdims=True)           # (TPB, 1) per-pixel max
    e = jnp.exp(masked - m_p)                              # (TPB, TM); off-segment -> exp(-1e30)=0
    denom = jnp.sum(e, axis=1, keepdims=True)              # (TPB, 1)
    scores = e * pl.reciprocal(denom, approx=False)        # per-pixel softmax, 0 off-segment
    # TODO(synk): attn_dropout is identity for p=0.0 (eval); stochastic dropout not implemented.

    # ctx[c, p] = sum_n key[c, p, n] * score[p, n]  -- contract the lane axis on the MXU.
    ctx = jax.lax.dot_general(
        k.astype(jnp.bfloat16), scores.astype(jnp.bfloat16),
        (((1,), (1,)), ((), ())),
        preferred_element_type=jnp.float32)                # (C8, TPB)

    # Broadcast ctx back over each pixel's N lanes (tiny exact 0/1 matmul, kept f32).
    ctx_b = jnp.dot(ctx, segt, preferred_element_type=jnp.float32)    # (C8, TM)

    out = jnp.maximum(v, 0.0) * ctx_b                      # (C8, TM) f32

    # Output projection (1x1 conv), bf16 operands / f32 accumulation.
    y = jnp.dot(wo_ref[...], out.astype(jnp.bfloat16),
                preferred_element_type=jnp.float32) + bo_ref[...]     # (C, TM)
    o_ref[0] = y.astype(o_ref.dtype)


# ---------------------------------------------------------------------------
# Tiling / VMEM budgeting (generation aware)
# ---------------------------------------------------------------------------
def _vmem_capacity_bytes():
    try:
        return int(pltpu.get_tpu_info().vmem_capacity_bytes)
    except Exception:
        return 64 << 20        # conservative (v7x-sized) default


def _vmem_estimate(C, C8, R, N, tm):
    """Rough per-step VMEM footprint: double-buffered I/O blocks + the live
    intermediates the kernel materializes + single-buffered constants."""
    f32, bf16 = 4, 2
    tpb = tm // N
    io = 2 * 2 * C * tm * f32                      # x-in + y-out blocks, double buffered
    qkv = R * tm * f32
    soft = 3 * tpb * tm * f32                      # masked / e / scores
    temps = (2 * C8 * tm * bf16                    # bf16 copies of k, v
             + C8 * tm * f32                       # ctx_b
             + C8 * tm * (f32 + bf16)              # out (f32) + bf16 copy
             + C * tm * f32)                       # y
    consts = (R * C + C * C8) * bf16 + (R + C) * f32 + tpb * tm * f32
    return io + qkv + soft + temps + consts


def _choose_tiling(B, P, N, C, C8, R, budget_bytes):
    """Pick (P_pad, TM) with TM = TPB*N: lane-dense (TM % 128 == 0 or full
    extent), within the VMEM budget, preferring >= 2 total grid steps so both
    v7x TensorCores get work. Pads P (with zero pixels, sliced off later)
    instead of falling back to a huge full-extent block."""
    M = P * N
    unit = _lcm(N, 128) // N       # smallest pixel count whose lane span is 128-aligned

    def pick(p_total, cands):
        m_total = p_total * N
        for need_two_steps in (True, False):
            ok = [tm for tm in cands
                  if _vmem_estimate(C, C8, R, N, tm) <= budget_bytes
                  and (not need_two_steps or B * (m_total // tm) >= 2)]
            if ok:
                return max(ok)
        return None

    # 1) No padding: TPB divides P and TM is 128-aligned (or the full extent).
    cands = [tpb * N for tpb in range(1, P + 1)
             if P % tpb == 0 and ((tpb * N) % 128 == 0 or tpb == P)]
    tm = pick(P, cands)
    if tm is not None:
        return P, tm
    # 2) Pad P so a lane-dense TM exists / fits the budget.
    p_pad = _round_up(max(P, unit), unit)
    cands = [tpb * N for tpb in range(unit, p_pad + 1, unit) if p_pad % tpb == 0]
    tm = pick(p_pad, cands)
    if tm is not None:
        return p_pad, tm
    # 3) Last resort: smallest lane-dense tile.
    return p_pad, unit * N


# ---------------------------------------------------------------------------
# Wrapper
# ---------------------------------------------------------------------------
def linear_self_attention_pallas(x, w_qkv, b_qkv, w_out, b_out):
    """x: (B, C, P, N) float32; weights are PyTorch Conv2d 1x1 squeezed to 2-D."""
    B, C, P, N = x.shape
    O = 1 + 2 * C
    assert w_qkv.shape == (O, C) and w_out.shape == (C, C)

    C8 = _round_up(C, 8)
    R = 8 + 2 * C8                        # fused projection rows: q (pad 8), k (pad C8), v (pad C8)

    cap = _vmem_capacity_bytes()
    vmem_limit = int(min(96 << 20, max(32 << 20, cap * 3 // 4)))   # 48 MiB on v7x, 96 MiB on 128 MiB parts
    budget = (vmem_limit * 6) // 10

    P_pad, TM = _choose_tiling(B, P, N, C, C8, R, budget)
    TPB = TM // N
    M = P * N
    M_pad = P_pad * N
    n_blocks = M_pad // TM

    f32 = jnp.float32
    bf16 = jnp.bfloat16

    # Trailing-dim collapse only -- no transpose.  Pad with zero pixels if needed.
    x3 = x.reshape(B, C, M)
    if M_pad != M:
        x3 = jnp.pad(x3, ((0, 0), (0, 0), (0, M_pad - M)))

    # Fused, sublane-aligned projection stack (padded rows are exactly zero).
    w_stack = jnp.zeros((R, C), f32)
    w_stack = w_stack.at[0:1].set(w_qkv[0:1])
    w_stack = w_stack.at[8:8 + C].set(w_qkv[1:1 + C])
    w_stack = w_stack.at[8 + C8:8 + C8 + C].set(w_qkv[1 + C:])
    b_stack = jnp.zeros((R, 1), f32)
    b_stack = b_stack.at[0, 0].set(b_qkv[0])
    b_stack = b_stack.at[8:8 + C, 0].set(b_qkv[1:1 + C])
    b_stack = b_stack.at[8 + C8:8 + C8 + C, 0].set(b_qkv[1 + C:])

    w_out_p = jnp.zeros((C, C8), f32).at[:, :C].set(w_out)
    b_out_c = b_out.reshape(C, 1).astype(f32)

    # bf16 matmul operands; accumulation stays f32 in-kernel.
    w_stack_bf = w_stack.astype(bf16)
    w_out_bf = w_out_p.astype(bf16)

    # One-hot pixel -> lane map (exact 0/1 in f32): segt[p, t] = 1 iff t // N == p.
    segt = (jnp.arange(TPB)[:, None] == (jnp.arange(TM)[None, :] // N)).astype(f32)

    grid = (B, n_blocks)
    kernel = functools.partial(_lsa_kernel, C8=C8)

    def _const_spec(shape, buffered):
        idx = lambda b, m: tuple(0 for _ in shape)
        if buffered:
            return pl.BlockSpec(shape, idx, pipeline_mode=pl.Buffered(1))
        return pl.BlockSpec(shape, idx)

    def _run(use_buffered):
        in_specs = [
            pl.BlockSpec((1, C, TM), lambda b, m: (b, 0, m)),        # x slab
            _const_spec((R, C), use_buffered),                       # fused qkv weight (bf16)
            _const_spec((C, C8), use_buffered),                      # out-proj weight (bf16)
            _const_spec((R, 1), use_buffered),                       # fused qkv bias
            _const_spec((C, 1), use_buffered),                       # out-proj bias
            _const_spec((TPB, TM), use_buffered),                    # pixel->lane map / mask
        ]
        return pl.pallas_call(
            kernel,
            out_shape=jax.ShapeDtypeStruct((B, C, M_pad), x.dtype),
            grid_spec=pltpu.PrefetchScalarGridSpec(
                num_scalar_prefetch=0,
                grid=grid,
                in_specs=in_specs,
                out_specs=pl.BlockSpec((1, C, TM), lambda b, m: (b, 0, m)),
            ),
            compiler_params=pltpu.CompilerParams(
                dimension_semantics=("parallel", "parallel"),
                vmem_limit_bytes=vmem_limit),
        )(x3, w_stack_bf, w_out_bf, b_stack, b_out_c, segt)

    try:
        out3 = _run(True)
    except Exception:
        # Fallback if pipeline_mode=pl.Buffered(1) is unsupported by this jax build.
        out3 = _run(False)

    out3 = out3[:, :, :M]
    return out3.reshape(B, C, P, N)


# ---------------------------------------------------------------------------
# Plain-JAX reference (mirrors the PyTorch forward, NCHW layout)
# ---------------------------------------------------------------------------
def linear_self_attention_ref(x, w_qkv, b_qkv, w_out, b_out):
    C = x.shape[1]
    qkv = jnp.einsum('oc,bcpn->bopn', w_qkv, x) + b_qkv[None, :, None, None]
    query = qkv[:, 0:1]
    key = qkv[:, 1:1 + C]
    value = qkv[:, 1 + C:]
    scores = jax.nn.softmax(query, axis=-1)
    ctx = jnp.sum(key * scores, axis=-1, keepdims=True)
    out = jax.nn.relu(value) * ctx
    out = jnp.einsum('oc,bcpn->bopn', w_out, out) + b_out[None, :, None, None]
    return out


if __name__ == "__main__":
    B, C, P, N = 2, 8, 16, 16   # batch, embed_dim, pixels/patch, num patches
    O = 1 + 2 * C

    key0 = jax.random.PRNGKey(0)
    k_x, k_wq, k_bq, k_wo, k_bo = jax.random.split(key0, 5)

    x = jax.random.normal(k_x, (B, C, P, N), dtype=jnp.float32)
    # Conv2d 1x1 weights (out_ch, in_ch, 1, 1) -> squeezed to (out_ch, in_ch)
    w_qkv = jax.random.normal(k_wq, (O, C), dtype=jnp.float32) / np.sqrt(C)
    b_qkv = jax.random.normal(k_bq, (O,), dtype=jnp.float32) * 0.1
    w_out = jax.random.normal(k_wo, (C, C), dtype=jnp.float32) / np.sqrt(C)
    b_out = jax.random.normal(k_bo, (C,), dtype=jnp.float32) * 0.1

    y = linear_self_attention_pallas(x, w_qkv, b_qkv, w_out, b_out)
    y = jax.block_until_ready(y)

    y_ref = linear_self_attention_ref(x, w_qkv, b_qkv, w_out, b_out)
    y_np, yr_np = np.asarray(y), np.asarray(y_ref)
    # bf16 matmul operands (f32 accumulation) -> model-level tolerance, not f32 unit-test tolerance.
    np.testing.assert_allclose(y_np, yr_np, rtol=6e-2, atol=6e-2)
    rel = np.linalg.norm(y_np - yr_np) / np.linalg.norm(yr_np)
    assert rel < 3e-2, f"relative Frobenius error too high: {rel}"
    print("KERNEL_OK")
</pallas_src>

<mosaic_0001>
module attributes {stable_mosaic.version = 11 : i64} {
  func.func @_lsa_kernel(%arg0: i32, %arg1: i32, %arg2: memref<1x8x256xf32, #tpu.memory_space<vmem>>, %arg3: memref<24x8xbf16, #tpu.memory_space<vmem>>, %arg4: memref<8x8xbf16, #tpu.memory_space<vmem>>, %arg5: memref<24x1xf32, #tpu.memory_space<vmem>>, %arg6: memref<8x1xf32, #tpu.memory_space<vmem>>, %arg7: memref<16x256xf32, #tpu.memory_space<vmem>>, %arg8: memref<1x8x256xf32, #tpu.memory_space<vmem>>) attributes {dimension_semantics = [#tpu.dimension_semantics<parallel>, #tpu.dimension_semantics<parallel>], iteration_bounds = array<i64: 2, 1>, scalar_prefetch = 0 : i64, scratch_operands = 0 : i64, tpu.core_type = #tpu.core_type<tc>, window_params = [{transform_indices = @transform_0, window_bounds = array<i64: 1, 8, 256>}, {pipeline_mode = #tpu.pipeline_mode<synchronous>, transform_indices = @transform_1, window_bounds = array<i64: 24, 8>}, {pipeline_mode = #tpu.pipeline_mode<synchronous>, transform_indices = @transform_2, window_bounds = array<i64: 8, 8>}, {pipeline_mode = #tpu.pipeline_mode<synchronous>, transform_indices = @transform_3, window_bounds = array<i64: 24, 1>}, {pipeline_mode = #tpu.pipeline_mode<synchronous>, transform_indices = @transform_4, window_bounds = array<i64: 8, 1>}, {pipeline_mode = #tpu.pipeline_mode<synchronous>, transform_indices = @transform_5, window_bounds = array<i64: 16, 256>}, {transform_indices = @transform_6, window_bounds = array<i64: 1, 8, 256>}]} {
    %c0 = arith.constant 0 : index
    %c0_0 = arith.constant 0 : index
    %c0_1 = arith.constant 0 : index
    %0 = vector.load %arg2[%c0, %c0_0, %c0_1] : memref<1x8x256xf32, #tpu.memory_space<vmem>>, vector<1x8x256xf32>
    %1 = vector.shape_cast %0 : vector<1x8x256xf32> to vector<8x256xf32>
    %2 = arith.truncf %1 : vector<8x256xf32> to vector<8x256xbf16>
    %c0_2 = arith.constant 0 : index
    %c0_3 = arith.constant 0 : index
    %3 = vector.load %arg7[%c0_2, %c0_3] : memref<16x256xf32, #tpu.memory_space<vmem>>, vector<16x256xf32>
    %c0_4 = arith.constant 0 : index
    %c0_5 = arith.constant 0 : index
    %4 = vector.load %arg3[%c0_4, %c0_5] : memref<24x8xbf16, #tpu.memory_space<vmem>>, vector<24x8xbf16>
    %cst = arith.constant dense<0.000000e+00> : vector<24x256xf32>
    %5 = tpu.matmul %4, %2, %cst {dimension_numbers = #tpu.dot_dimension_numbers<[1], [0], [0], [1], [0, 0, 1, 1], [], []>} : vector<24x8xbf16>, vector<8x256xbf16>, vector<24x256xf32> -> vector<24x256xf32>
    %c0_6 = arith.constant 0 : index
    %c0_7 = arith.constant 0 : index
    %6 = vector.load %arg5[%c0_6, %c0_7] : memref<24x1xf32, #tpu.memory_space<vmem>>, vector<24x1xf32>
    %7 = vector.broadcast %6 : vector<24x1xf32> to vector<24x256xf32>
    %8 = arith.addf %5, %7 : vector<24x256xf32>
    %9 = vector.extract_strided_slice %8 {offsets = [0, 0], sizes = [1, 256], strides = [1, 1]} : vector<24x256xf32> to vector<1x256xf32>
    %10 = vector.extract_strided_slice %8 {offsets = [8, 0], sizes = [8, 256], strides = [1, 1]} : vector<24x256xf32> to vector<8x256xf32>
    %11 = vector.extract_strided_slice %8 {offsets = [16, 0], sizes = [8, 256], strides = [1, 1]} : vector<24x256xf32> to vector<8x256xf32>
    %cst_8 = arith.constant 5.000000e-01 : f32
    %12 = vector.broadcast %cst_8 : f32 to vector<16x256xf32>
    %13 = arith.cmpf ogt, %3, %12 : vector<16x256xf32>
    %cst_9 = arith.constant -1.000000e+30 : f32
    %14 = vector.shape_cast %9 : vector<1x256xf32> to vector<1x256xf32>
    %15 = vector.broadcast %14 : vector<1x256xf32> to vector<16x256xf32>
    %16 = vector.broadcast %cst_9 : f32 to vector<16x256xf32>
    %17 = arith.select %13, %15, %16 : vector<16x256xi1>, vector<16x256xf32>
    %cst_10 = arith.constant dense<0xFF800000> : vector<16xf32>
    %18 = vector.multi_reduction <maximumf>, %17, %cst_10 [1] : vector<16x256xf32> to vector<16xf32>
    %19 = vector.shape_cast %18 : vector<16xf32> to vector<16x1xf32>
    %20 = vector.broadcast %19 : vector<16x1xf32> to vector<16x256xf32>
    %21 = arith.subf %17, %20 : vector<16x256xf32>
    %22 = math.exp %21 : vector<16x256xf32>
    %cst_11 = arith.constant dense<0.000000e+00> : vector<16xf32>
    %23 = vector.multi_reduction <add>, %22, %cst_11 [1] : vector<16x256xf32> to vector<16xf32>
    %24 = vector.shape_cast %23 : vector<16xf32> to vector<16x1xf32>
    %25 = tpu.reciprocal %24 : vector<16x1xf32> -> vector<16x1xf32>
    %26 = vector.broadcast %25 : vector<16x1xf32> to vector<16x256xf32>
    %27 = arith.mulf %22, %26 : vector<16x256xf32>
    %28 = arith.truncf %10 : vector<8x256xf32> to vector<8x256xbf16>
    %29 = arith.truncf %27 : vector<16x256xf32> to vector<16x256xbf16>
    %cst_12 = arith.constant dense<0.000000e+00> : vector<8x16xf32>
    %30 = tpu.matmul %28, %29, %cst_12 {dimension_numbers = #tpu.dot_dimension_numbers<[1], [1], [0], [0], [0, 0, 1, 0], [], []>} : vector<8x256xbf16>, vector<16x256xbf16>, vector<8x16xf32> -> vector<8x16xf32>
    %cst_13 = arith.constant dense<0.000000e+00> : vector<8x256xf32>
    %31 = tpu.matmul %30, %3, %cst_13 {dimension_numbers = #tpu.dot_dimension_numbers<[1], [0], [0], [1], [0, 0, 1, 1], [], []>} : vector<8x16xf32>, vector<16x256xf32>, vector<8x256xf32> -> vector<8x256xf32>
    %cst_14 = arith.constant 0.000000e+00 : f32
    %32 = vector.broadcast %cst_14 : f32 to vector<8x256xf32>
    %33 = arith.maximumf %11, %32 : vector<8x256xf32>
    %34 = arith.mulf %33, %31 : vector<8x256xf32>
    %c0_15 = arith.constant 0 : index
    %c0_16 = arith.constant 0 : index
    %35 = vector.load %arg4[%c0_15, %c0_16] : memref<8x8xbf16, #tpu.memory_space<vmem>>, vector<8x8xbf16>
    %36 = arith.truncf %34 : vector<8x256xf32> to vector<8x256xbf16>
    %cst_17 = arith.constant dense<0.000000e+00> : vector<8x256xf32>
    %37 = tpu.matmul %35, %36, %cst_17 {dimension_numbers = #tpu.dot_dimension_numbers<[1], [0], [0], [1], [0, 0, 1, 1], [], []>} : vector<8x8xbf16>, vector<8x256xbf16>, vector<8x256xf32> -> vector<8x256xf32>
    %c0_18 = arith.constant 0 : index
    %c0_19 = arith.constant 0 : index
    %38 = vector.load %arg6[%c0_18, %c0_19] : memref<8x1xf32, #tpu.memory_space<vmem>>, vector<8x1xf32>
    %39 = vector.broadcast %38 : vector<8x1xf32> to vector<8x256xf32>
    %40 = arith.addf %37, %39 : vector<8x256xf32>
    %c0_20 = arith.constant 0 : index
    %c0_21 = arith.constant 0 : index
    %c0_22 = arith.constant 0 : index
    %41 = vector.load %arg8[%c0_20, %c0_21, %c0_22] : memref<1x8x256xf32, #tpu.memory_space<vmem>>, vector<1x8x256xf32>
    %42 = vector.shape_cast %41 : vector<1x8x256xf32> to vector<8x256xf32>
    %43 = vector.shape_cast %40 : vector<8x256xf32> to vector<1x8x256xf32>
    tpu.vector_store %arg8[%c0_20, %c0_21, %c0_22], %43 {strides = array<i32>} : memref<1x8x256xf32, #tpu.memory_space<vmem>>, vector<1x8x256xf32>,
    return
  }
  func.func @transform_0(%arg0: i32, %arg1: i32) -> (i32, i32, i32) {
    %c0_i32 = arith.constant 0 : i32
    %c0_i32_0 = arith.constant 0 : i32
    return %arg0, %c0_i32, %arg1 : i32, i32, i32
  }
  func.func @transform_1(%arg0: i32, %arg1: i32) -> (i32, i32) {
    %c0_i32 = arith.constant 0 : i32
    %c0_i32_0 = arith.constant 0 : i32
    %c0_i32_1 = arith.constant 0 : i32
    return %c0_i32, %c0_i32_0 : i32, i32
  }
  func.func @transform_2(%arg0: i32, %arg1: i32) -> (i32, i32) {
    %c0_i32 = arith.constant 0 : i32
    %c0_i32_0 = arith.constant 0 : i32
    %c0_i32_1 = arith.constant 0 : i32
    return %c0_i32, %c0_i32_0 : i32, i32
  }
  func.func @transform_3(%arg0: i32, %arg1: i32) -> (i32, i32) {
    %c0_i32 = arith.constant 0 : i32
    %c0_i32_0 = arith.constant 0 : i32
    %c0_i32_1 = arith.constant 0 : i32
    return %c0_i32, %c0_i32_0 : i32, i32
  }
  func.func @transform_4(%arg0: i32, %arg1: i32) -> (i32, i32) {
    %c0_i32 = arith.constant 0 : i32
    %c0_i32_0 = arith.constant 0 : i32
    %c0_i32_1 = arith.constant 0 : i32
    return %c0_i32, %c0_i32_0 : i32, i32
  }
  func.func @transform_5(%arg0: i32, %arg1: i32) -> (i32, i32) {
    %c0_i32 = arith.constant 0 : i32
    %c0_i32_0 = arith.constant 0 : i32
    %c0_i32_1 = arith.constant 0 : i32
    return %c0_i32, %c0_i32_0 : i32, i32
  }
  func.func @transform_6(%arg0: i32, %arg1: i32) -> (i32, i32, i32) {
    %c0_i32 = arith.constant 0 : i32
    %c0_i32_0 = arith.constant 0 : i32
    return %arg0, %c0_i32, %arg1 : i32, i32, i32
  }
}

module attributes {stable_mosaic.version = 11 : i64} {
  func.func @_lsa_kernel(%arg0: i32, %arg1: i32, %arg2: memref<1x8x256xf32, #tpu.memory_space<vmem>>, %arg3: memref<24x8xbf16, #tpu.memory_space<vmem>>, %arg4: memref<8x8xbf16, #tpu.memory_space<vmem>>, %arg5: memref<24x1xf32, #tpu.memory_space<vmem>>, %arg6: memref<8x1xf32, #tpu.memory_space<vmem>>, %arg7: memref<16x256xf32, #tpu.memory_space<vmem>>, %arg8: memref<1x8x256xf32, #tpu.memory_space<vmem>>) attributes {dimension_semantics = [#tpu.dimension_semantics<parallel>, #tpu.dimension_semantics<parallel>], iteration_bounds = array<i64: 2, 1>, scalar_prefetch = 0 : i64, scratch_operands = 0 : i64, tpu.core_type = #tpu.core_type<tc>, window_params = [{transform_indices = @transform_0, window_bounds = array<i64: 1, 8, 256>}, {pipeline_mode = #tpu.pipeline_mode<synchronous>, transform_indices = @transform_1, window_bounds = array<i64: 24, 8>}, {pipeline_mode = #tpu.pipeline_mode<synchronous>, transform_indices = @transform_2, window_bounds = array<i64: 8, 8>}, {pipeline_mode = #tpu.pipeline_mode<synchronous>, transform_indices = @transform_3, window_bounds = array<i64: 24, 1>}, {pipeline_mode = #tpu.pipeline_mode<synchronous>, transform_indices = @transform_4, window_bounds = array<i64: 8, 1>}, {pipeline_mode = #tpu.pipeline_mode<synchronous>, transform_indices = @transform_5, window_bounds = array<i64: 16, 256>}, {transform_indices = @transform_6, window_bounds = array<i64: 1, 8, 256>}]} {
    %c0 = arith.constant 0 : index
    %c0_0 = arith.constant 0 : index
    %c0_1 = arith.constant 0 : index
    %0 = vector.load %arg2[%c0, %c0_0, %c0_1] : memref<1x8x256xf32, #tpu.memory_space<vmem>>, vector<1x8x256xf32>
    %1 = vector.shape_cast %0 : vector<1x8x256xf32> to vector<8x256xf32>
    %2 = arith.truncf %1 : vector<8x256xf32> to vector<8x256xbf16>
    %c0_2 = arith.constant 0 : index
    %c0_3 = arith.constant 0 : index
    %3 = vector.load %arg7[%c0_2, %c0_3] : memref<16x256xf32, #tpu.memory_space<vmem>>, vector<16x256xf32>
    %c0_4 = arith.constant 0 : index
    %c0_5 = arith.constant 0 : index
    %4 = vector.load %arg3[%c0_4, %c0_5] : memref<24x8xbf16, #tpu.memory_space<vmem>>, vector<24x8xbf16>
    %cst = arith.constant dense<0.000000e+00> : vector<24x256xf32>
    %5 = tpu.matmul %4, %2, %cst {dimension_numbers = #tpu.dot_dimension_numbers<[1], [0], [0], [1], [0, 0, 1, 1], [], []>} : vector<24x8xbf16>, vector<8x256xbf16>, vector<24x256xf32> -> vector<24x256xf32>
    %c0_6 = arith.constant 0 : index
    %c0_7 = arith.constant 0 : index
    %6 = vector.load %arg5[%c0_6, %c0_7] : memref<24x1xf32, #tpu.memory_space<vmem>>, vector<24x1xf32>
    %7 = vector.broadcast %6 : vector<24x1xf32> to vector<24x256xf32>
    %8 = arith.addf %5, %7 : vector<24x256xf32>
    %9 = vector.extract_strided_slice %8 {offsets = [0, 0], sizes = [1, 256], strides = [1, 1]} : vector<24x256xf32> to vector<1x256xf32>
    %10 = vector.extract_strided_slice %8 {offsets = [8, 0], sizes = [8, 256], strides = [1, 1]} : vector<24x256xf32> to vector<8x256xf32>
    %11 = vector.extract_strided_slice %8 {offsets = [16, 0], sizes = [8, 256], strides = [1, 1]} : vector<24x256xf32> to vector<8x256xf32>
    %cst_8 = arith.constant 5.000000e-01 : f32
    %12 = vector.broadcast %cst_8 : f32 to vector<16x256xf32>
    %13 = arith.cmpf ogt, %3, %12 : vector<16x256xf32>
    %cst_9 = arith.constant -1.000000e+30 : f32
    %14 = vector.shape_cast %9 : vector<1x256xf32> to vector<1x256xf32>
    %15 = vector.broadcast %14 : vector<1x256xf32> to vector<16x256xf32>
    %16 = vector.broadcast %cst_9 : f32 to vector<16x256xf32>
    %17 = arith.select %13, %15, %16 : vector<16x256xi1>, vector<16x256xf32>
    %cst_10 = arith.constant dense<0xFF800000> : vector<16xf32>
    %18 = vector.multi_reduction <maximumf>, %17, %cst_10 [1] : vector<16x256xf32> to vector<16xf32>
    %19 = vector.shape_cast %18 : vector<16xf32> to vector<16x1xf32>
    %20 = vector.broadcast %19 : vector<16x1xf32> to vector<16x256xf32>
    %21 = arith.subf %17, %20 : vector<16x256xf32>
    %22 = math.exp %21 : vector<16x256xf32>
    %cst_11 = arith.constant dense<0.000000e+00> : vector<16xf32>
    %23 = vector.multi_reduction <add>, %22, %cst_11 [1] : vector<16x256xf32> to vector<16xf32>
    %24 = vector.shape_cast %23 : vector<16xf32> to vector<16x1xf32>
    %25 = tpu.reciprocal %24 : vector<16x1xf32> -> vector<16x1xf32>
    %26 = vector.broadcast %25 : vector<16x1xf32> to vector<16x256xf32>
    %27 = arith.mulf %22, %26 : vector<16x256xf32>
    %28 = arith.truncf %10 : vector<8x256xf32> to vector<8x256xbf16>
    %29 = arith.truncf %27 : vector<16x256xf32> to vector<16x256xbf16>
    %cst_12 = arith.constant dense<0.000000e+00> : vector<8x16xf32>
    %30 = tpu.matmul %28, %29, %cst_12 {dimension_numbers = #tpu.dot_dimension_numbers<[1], [1], [0], [0], [0, 0, 1, 0], [], []>} : vector<8x256xbf16>, vector<16x256xbf16>, vector<8x16xf32> -> vector<8x16xf32>
    %cst_13 = arith.constant dense<0.000000e+00> : vector<8x256xf32>
    %31 = tpu.matmul %30, %3, %cst_13 {dimension_numbers = #tpu.dot_dimension_numbers<[1], [0], [0], [1], [0, 0, 1, 1], [], []>} : vector<8x16xf32>, vector<16x256xf32>, vector<8x256xf32> -> vector<8x256xf32>
    %cst_14 = arith.constant 0.000000e+00 : f32
    %32 = vector.broadcast %cst_14 : f32 to vector<8x256xf32>
    %33 = arith.maximumf %11, %32 : vector<8x256xf32>
    %34 = arith.mulf %33, %31 : vector<8x256xf32>
    %c0_15 = arith.constant 0 : index
    %c0_16 = arith.constant 0 : index
    %35 = vector.load %arg4[%c0_15, %c0_16] : memref<8x8xbf16, #tpu.memory_space<vmem>>, vector<8x8xbf16>
    %36 = arith.truncf %34 : vector<8x256xf32> to vector<8x256xbf16>
    %cst_17 = arith.constant dense<0.000000e+00> : vector<8x256xf32>
    %37 = tpu.matmul %35, %36, %cst_17 {dimension_numbers = #tpu.dot_dimension_numbers<[1], [0], [0], [1], [0, 0, 1, 1], [], []>} : vector<8x8xbf16>, vector<8x256xbf16>, vector<8x256xf32> -> vector<8x256xf32>
    %c0_18 = arith.constant 0 : index
    %c0_19 = arith.constant 0 : index
    %38 = vector.load %arg6[%c0_18, %c0_19] : memref<8x1xf32, #tpu.memory_space<vmem>>, vector<8x1xf32>
    %39 = vector.broadcast %38 : vector<8x1xf32> to vector<8x256xf32>
    %40 = arith.addf %37, %39 : vector<8x256xf32>
    %c0_20 = arith.constant 0 : index
    %c0_21 = arith.constant 0 : index
    %c0_22 = arith.constant 0 : index
    %41 = vector.load %arg8[%c0_20, %c0_21, %c0_22] : memref<1x8x256xf32, #tpu.memory_space<vmem>>, vector<1x8x256xf32>
    %42 = vector.shape_cast %41 : vector<1x8x256xf32> to vector<8x256xf32>
    %43 = vector.shape_cast %40 : vector<8x256xf32> to vector<1x8x256xf32>
    tpu.vector_store %arg8[%c0_20, %c0_21, %c0_22], %43 {strides = array<i32>} : memref<1x8x256xf32, #tpu.memory_space<vmem>>, vector<1x8x256xf32>,
    return
  }
  func.func @transform_0(%arg0: i32, %arg1: i32) -> (i32, i32, i32) {
    %c0_i32 = arith.constant 0 : i32
    %c0_i32_0 = arith.constant 0 : i32
    return %arg0, %c0_i32, %arg1 : i32, i32, i32
  }
  func.func @transform_1(%arg0: i32, %arg1: i32) -> (i32, i32) {
    %c0_i32 = arith.constant 0 : i32
    %c0_i32_0 = arith.constant 0 : i32
    %c0_i32_1 = arith.constant 0 : i32
    return %c0_i32, %c0_i32_0 : i32, i32
  }
  func.func @transform_2(%arg0: i32, %arg1: i32) -> (i32, i32) {
    %c0_i32 = arith.constant 0 : i32
    %c0_i32_0 = arith.constant 0 : i32
    %c0_i32_1 = arith.constant 0 : i32
    return %c0_i32, %c0_i32_0 : i32, i32
  }
  func.func @transform_3(%arg0: i32, %arg1: i32) -> (i32, i32) {
    %c0_i32 = arith.constant 0 : i32
    %c0_i32_0 = arith.constant 0 : i32
    %c0_i32_1 = arith.constant 0 : i32
    return %c0_i32, %c0_i32_0 : i32, i32
  }
  func.func @transform_4(%arg0: i32, %arg1: i32) -> (i32, i32) {
    %c0_i32 = arith.constant 0 : i32
    %c0_i32_0 = arith.constant 0 : i32
    %c0_i32_1 = arith.constant 0 : i32
    return %c0_i32, %c0_i32_0 : i32, i32
  }
  func.func @transform_5(%arg0: i32, %arg1: i32) -> (i32, i32) {
    %c0_i32 = arith.constant 0 : i32
    %c0_i32_0 = arith.constant 0 : i32
    %c0_i32_1 = arith.constant 0 : i32
    return %c0_i32, %c0_i32_0 : i32, i32
  }
  func.func @transform_6(%arg0: i32, %arg1: i32) -> (i32, i32, i32) {
    %c0_i32 = arith.constant 0 : i32
    %c0_i32_0 = arith.constant 0 : i32
    return %arg0, %c0_i32, %arg1 : i32, i32, i32
  }
}

</mosaic_0001>

<llo_original>
// kernel: tpu_custom_call.1
$region0: #{tpu_custom_call.1}
  #allocation0 [shape = 'u32[]', space=smem, size = 0x4, offset = 0x4, fixed_abs, tag = 'smem constant byte address 0x4 - core index']
  #allocation1 [shape = 'u32[144,128]{1,0:T(1,128)}', space=vmem, size = 0x12000, scoped, tag = 'internal scratch']
  %s0 = inlined_call_operand.vmem [shape: f32[2,8,256], index: 0, kind: input, shape index: {}]
  %s1 = inlined_call_operand.vmem [shape: bf16[24,8], index: 1, kind: input, shape index: {}]
  %s2 = inlined_call_operand.hbm [shape: bf16[8,8], index: 2, kind: input, shape index: {}]
  %s3 = inlined_call_operand.vmem [shape: f32[24,1], index: 3, kind: input, shape index: {}]
  %s4 = inlined_call_operand.vmem [shape: f32[8,1], index: 4, kind: input, shape index: {}]
  %s5 = inlined_call_operand.vmem [shape: f32[16,256], index: 5, kind: input, shape index: {}]
  %s6 = inlined_call_operand.hbm [shape: f32[2,8,256], index: 6, kind: output, shape index: {}]
  %s7 = sld [smem:[#allocation0]]
  $region61: #{tpu_custom_call.1} parent=0
    _
  %s9 = ssub.s32 1, %s7
  %s10 = scalar_select 0, %s9, %s7
  $region1: #{tpu_custom_call.1} parent=0
    #allocation2 [shape = 'u8[2048]{0}', space=vmem, size = 0x800, scoped, tag = 'input window, operand 2, single buffered']
    #allocation3 [shape = 's32[2]{0}', space=sflag, size = 0x8, scoped, tag = 'scoped memory for tpu_custom_call.1']
    #allocation4 [shape = 's32[2]{0}', space=sflag, size = 0x8, scoped, tag = 'scoped memory for tpu_custom_call.1']
    #allocation5 [shape = 'u8[16384]{0}', space=vmem, size = 0x4000, scoped, tag = 'output window, operand 0']
    %11 = vsyncpa [#allocation3], 0
    %12 = vsyncpa [#allocation4], 0
    %s13 = scalar_lea.sflag [#allocation4], 1
    %14 = vsyncpa %s13, 0
    loop: start=0, step=1, limit=4
    $region2: #{tpu_custom_call.1} parent=1 // loop_pre_header
      _
    $region3: #{tpu_custom_call.1} parent=1 // loop_header
      %s16 = sphi 0, %s20
      %p17 = scmp.ge.s32.totalorder %s16, 4
      %s23 = sphi 0, %s35
      %s24 = sphi 0, %s31
      %s25 = sphi 0, %s23
      %s26 = sphi 0, %s24
      %s27 = sphi 0, %s25
      %s28 = sphi 0, %s26
      %s40 = sphi 0, %s42
      %s43 = sphi 0, %s40
      %s44 = sphi 0, %s43
      %s60 = sphi 0, %s44
      %s64 = sphi 0, %s64
      %s66 = sphi 0, %s64
      %s67 = sphi 0, %s66
      %s81 = sphi 0, %s67
      %s85 = sphi 0, %s85
      %s87 = sphi 0, %s85
      %s88 = sphi 0, %s87
      %s102 = sphi 0, %s88
      %s106 = sphi 0, %s106
      %s108 = sphi 0, %s106
      %s109 = sphi 0, %s108
      %s123 = sphi 0, %s109
      %s127 = sphi 0, %s127
      %s129 = sphi 0, %s127
      %s130 = sphi 0, %s129
      %s144 = sphi 0, %s130
      %s148 = sphi 0, %s148
      %s150 = sphi 0, %s148
      %s151 = sphi 0, %s150
      %s165 = sphi 0, %s151
      %s173 = sphi 0, %s175
      %s176 = sphi 0, %s173
      %s177 = sphi 0, %s176
      %s193 = sphi 0, %s177
    $region4: #{tpu_custom_call.1} parent=1 // loop_header_branch
      %19 = sbr.rel (%p17) target = $region8
    $region5: #{tpu_custom_call.1} parent=1 // loop_body
      %s21 = ssub.s32 %s16, 1
      %s22 = ssub.s32 %s16, 2
      %s29 = sadd.s32 1, %s24
      %p30 = scmp.ge.s32.totalorder %s29, 1
      %s31 = scalar_select %p30, 0, %s29
      %s32 = sadd.s32 1, %s23
      %s33 = scalar_select %p30, %s32, %s23
      %p34 = scmp.ge.s32.totalorder %s33, 2
      %s35 = scalar_select %p34, 0, %s33
      %s36 = ssub.s32 %s23, %s35
      %s37 = ssub.s32 %s24, %s31
      %s38 = sor.u32 %s36, %s37
      %p39 = scmp.eq.s32.totalorder %s38, 0
      %s41 = sadd.s32 %s40, 1
      %s42 = scalar_select %p39, %s40, %s41
      %p45 = pneg %p39
      %p46 = scmp.eq.s32.totalorder %s16, 1
      %p47 = por %p45, %p46
      %p48 = scmp.ne.s32.totalorder %s40, %s43
      %p49 = scmp.eq.s32.totalorder %s16, 0
      %p50 = por %p48, %p49
      %p51 = scmp.ne.s32.totalorder %s40, %s43
      %p52 = scmp.eq.s32.totalorder %s21, 1
      %p53 = por %p51, %p52
      %p54 = scmp.ne.s32.totalorder %s43, %s44
      %p55 = scmp.eq.s32.totalorder %s21, 0
      %p56 = por %p54, %p55
      %p57 = scmp.ne.s32.totalorder %s43, %s44
      %p58 = scmp.eq.s32.totalorder %s22, 1
      %p59 = por %p57, %p58
      %p61 = scmp.ne.s32.totalorder %s44, %s60
      %p62 = scmp.eq.s32.totalorder %s22, 0
      %p63 = por %p61, %p62
      %s65 = sadd.s32 %s64, 1
      %p68 = scmp.eq.s32.totalorder %s16, 1
      %p69 = scmp.ne.s32.totalorder %s64, %s66
      %p70 = scmp.eq.s32.totalorder %s16, 0
      %p71 = por %p69, %p70
      %p72 = scmp.ne.s32.totalorder %s64, %s66
      %p73 = scmp.eq.s32.totalorder %s21, 1
      %p74 = por %p72, %p73
      %p75 = scmp.ne.s32.totalorder %s66, %s67
      %p76 = scmp.eq.s32.totalorder %s21, 0
      %p77 = por %p75, %p76
      %p78 = scmp.ne.s32.totalorder %s66, %s67
      %p79 = scmp.eq.s32.totalorder %s22, 1
      %p80 = por %p78, %p79
      %p82 = scmp.ne.s32.totalorder %s67, %s81
      %p83 = scmp.eq.s32.totalorder %s22, 0
      %p84 = por %p82, %p83
      %s86 = sadd.s32 %s85, 1
      %p89 = scmp.eq.s32.totalorder %s16, 1
      %p90 = scmp.ne.s32.totalorder %s85, %s87
      %p91 = scmp.eq.s32.totalorder %s16, 0
      %p92 = por %p90, %p91
      %p93 = scmp.ne.s32.totalorder %s85, %s87
      %p94 = scmp.eq.s32.totalorder %s21, 1
      %p95 = por %p93, %p94
      %p96 = scmp.ne.s32.totalorder %s87, %s88
      %p97 = scmp.eq.s32.totalorder %s21, 0
      %p98 = por %p96, %p97
      %p99 = scmp.ne.s32.totalorder %s87, %s88
      %p100 = scmp.eq.s32.totalorder %s22, 1
      %p101 = por %p99, %p100
      %p103 = scmp.ne.s32.totalorder %s88, %s102
      %p104 = scmp.eq.s32.totalorder %s22, 0
      %p105 = por %p103, %p104
      %s107 = sadd.s32 %s106, 1
      %p110 = scmp.eq.s32.totalorder %s16, 1
      %p111 = scmp.ne.s32.totalorder %s106, %s108
      %p112 = scmp.eq.s32.totalorder %s16, 0
      %p113 = por %p111, %p112
      %p114 = scmp.ne.s32.totalorder %s106, %s108
      %p115 = scmp.eq.s32.totalorder %s21, 1
      %p116 = por %p114, %p115
      %p117 = scmp.ne.s32.totalorder %s108, %s109
      %p118 = scmp.eq.s32.totalorder %s21, 0
      %p119 = por %p117, %p118
      %p120 = scmp.ne.s32.totalorder %s108, %s109
      %p121 = scmp.eq.s32.totalorder %s22, 1
      %p122 = por %p120, %p121
      %p124 = scmp.ne.s32.totalorder %s109, %s123
      %p125 = scmp.eq.s32.totalorder %s22, 0
      %p126 = por %p124, %p125
      %s128 = sadd.s32 %s127, 1
      %p131 = scmp.eq.s32.totalorder %s16, 1
      %p132 = scmp.ne.s32.totalorder %s127, %s129
      %p133 = scmp.eq.s32.totalorder %s16, 0
      %p134 = por %p132, %p133
      %p135 = scmp.ne.s32.totalorder %s127, %s129
      %p136 = scmp.eq.s32.totalorder %s21, 1
      %p137 = por %p135, %p136
      %p138 = scmp.ne.s32.totalorder %s129, %s130
      %p139 = scmp.eq.s32.totalorder %s21, 0
      %p140 = por %p138, %p139
      %p141 = scmp.ne.s32.totalorder %s129, %s130
      %p142 = scmp.eq.s32.totalorder %s22, 1
      %p143 = por %p141, %p142
      %p145 = scmp.ne.s32.totalorder %s130, %s144
      %p146 = scmp.eq.s32.totalorder %s22, 0
      %p147 = por %p145, %p146
      %s149 = sadd.s32 %s148, 1
      %p152 = scmp.eq.s32.totalorder %s16, 1
      %p153 = scmp.ne.s32.totalorder %s148, %s150
      %p154 = scmp.eq.s32.totalorder %s16, 0
      %p155 = por %p153, %p154
      %p156 = scmp.ne.s32.totalorder %s148, %s150
      %p157 = scmp.eq.s32.totalorder %s21, 1
      %p158 = por %p156, %p157
      %p159 = scmp.ne.s32.totalorder %s150, %s151
      %p160 = scmp.eq.s32.totalorder %s21, 0
      %p161 = por %p159, %p160
      %p162 = scmp.ne.s32.totalorder %s150, %s151
      %p163 = scmp.eq.s32.totalorder %s22, 1
      %p164 = por %p162, %p163
      %p166 = scmp.ne.s32.totalorder %s151, %s165
      %p167 = scmp.eq.s32.totalorder %s22, 0
      %p168 = por %p166, %p167
      %s169 = ssub.s32 %s23, %s35
      %s170 = ssub.s32 %s24, %s31
      %s171 = sor.u32 %s169, %s170
      %p172 = scmp.eq.s32.totalorder %s171, 0
      %s174 = sadd.s32 %s173, 1
      %s175 = scalar_select %p172, %s173, %s174
      %p178 = pneg %p172
      %p179 = scmp.eq.s32.totalorder %s16, 1
      %p180 = por %p178, %p179
      %p181 = scmp.ne.s32.totalorder %s173, %s176
      %p182 = scmp.eq.s32.totalorder %s16, 0
      %p183 = por %p181, %p182
      %p184 = scmp.ne.s32.totalorder %s173, %s176
      %p185 = scmp.eq.s32.totalorder %s21, 1
      %p186 = por %p184, %p185
      %p187 = scmp.ne.s32.totalorder %s176, %s177
      %p188 = scmp.eq.s32.totalorder %s21, 0
      %p189 = por %p187, %p188
      %p190 = scmp.ne.s32.totalorder %s176, %s177
      %p191 = scmp.eq.s32.totalorder %s22, 1
      %p192 = por %p190, %p191
      %p194 = scmp.ne.s32.totalorder %s177, %s193
      %p195 = scmp.eq.s32.totalorder %s22, 0
      %p196 = por %p194, %p195
      %p197 = scmp.le.s32.totalorder 1, %s16
      %p198 = scmp.lt.s32.totalorder %s16, 3
      %p199 = pnand %p197, %p198
      %p200 = pneg %p199
      // Predicated region
      $region9: #{tpu_custom_call.1} parent=5 // pred_check
        _
      $region10: #{tpu_custom_call.1} parent=5 // pred_check_branch
        %202 = sbr.rel (%p199) target = $region12
      $region11: #{tpu_custom_call.1} parent=5 // pred_region
        %s203 = ssub.s32 %s16, 1
        // Predicated region
        $region13: #{tpu_custom_call.1} parent=11 // pred_check
          %p204 = pneg %p77
        $region14: #{tpu_custom_call.1} parent=11 // pred_check_branch
          %206 = sbr.rel (%p204) target = $region16
        $region15: #{tpu_custom_call.1} parent=11 // pred_region
          _
        $region16: #{tpu_custom_call.1} parent=11 // pred_fallthru
          _
        // Predicated region
        $region17: #{tpu_custom_call.1} parent=11 // pred_check
          %p207 = pneg %p98
        $region18: #{tpu_custom_call.1} parent=11 // pred_check_branch
          %209 = sbr.rel (%p207) target = $region20
        $region19: #{tpu_custom_call.1} parent=11 // pred_region
          %s211 = ssub.s32 64, 64
          %212 = vsyncadd [#allocation3], %s211
          %s214 = sshll.u32 [#allocation2], 4
          %s215 = int_to_ptr.vmem [resolvable:$true] %s214
          %217 = dma.hbm_to_vmem [thread:$0]  %s2, 64, %s215, [#allocation3]
        $region20: #{tpu_custom_call.1} parent=11 // pred_fallthru
          _
        // Predicated region
        $region21: #{tpu_custom_call.1} parent=11 // pred_check
          %p218 = pneg %p119
        $region22: #{tpu_custom_call.1} parent=11 // pred_check_branch
          %220 = sbr.rel (%p218) target = $region24
        $region23: #{tpu_custom_call.1} parent=11 // pred_region
          _
        $region24: #{tpu_custom_call.1} parent=11 // pred_fallthru
          _
        // Predicated region
        $region25: #{tpu_custom_call.1} parent=11 // pred_check
          %p221 = pneg %p140
        $region26: #{tpu_custom_call.1} parent=11 // pred_check_branch
          %223 = sbr.rel (%p221) target = $region28
        $region27: #{tpu_custom_call.1} parent=11 // pred_region
          _
        $region28: #{tpu_custom_call.1} parent=11 // pred_fallthru
          _
        // Predicated region
        $region29: #{tpu_custom_call.1} parent=11 // pred_check
          %p224 = pneg %p161
        $region30: #{tpu_custom_call.1} parent=11 // pred_check_branch
          %226 = sbr.rel (%p224) target = $region32
        $region31: #{tpu_custom_call.1} parent=11 // pred_region
          _
        $region32: #{tpu_custom_call.1} parent=11 // pred_fallthru
          _
      $region12: #{tpu_custom_call.1} parent=5 // pred_fallthru
        _
      %p227 = scmp.lt.s32.totalorder %s16, 2
      // Predicated region
      $region33: #{tpu_custom_call.1} parent=5 // pred_check
        %p228 = pneg %p227
      $region34: #{tpu_custom_call.1} parent=5 // pred_check_branch
        %230 = sbr.rel (%p228) target = $region36
      $region35: #{tpu_custom_call.1} parent=5 // pred_region
        // Predicated region
        $region37: #{tpu_custom_call.1} parent=35 // pred_check
          %p231 = pneg %p50
        $region38: #{tpu_custom_call.1} parent=35 // pred_check_branch
          %233 = sbr.rel (%p231) target = $region40
        $region39: #{tpu_custom_call.1} parent=35 // pred_region
          %s234 = smul.u32 2, %s24
          %p235 = scmp.lt.s32.totalorder %s23, 1
          %s236 = scalar_select %p235, %s23, 1
          %p237 = scmp.lt.s32.totalorder %s234, 1
          %s238 = scalar_select %p237, %s234, 1
          %s239 = smul.addr %s236, 2
          %s240 = sadd.s32 %s238, %s239
          %s241 = smul.addr %s240, 8
          %s242 = scalar_lea.vmem %s0, %s241
          %s243 = smul.u32 2, %s24
        $region40: #{tpu_custom_call.1} parent=35 // pred_fallthru
          _
      $region36: #{tpu_custom_call.1} parent=5 // pred_fallthru
        _
      %p244 = scmp.le.s32.totalorder 1, %s16
      %p245 = scmp.lt.s32.totalorder %s16, 3
      %p246 = pnand %p244, %p245
      %p247 = pneg %p246
      // Predicated region
      $region41: #{tpu_custom_call.1} parent=5 // pred_check
        _
      $region42: #{tpu_custom_call.1} parent=5 // pred_check_branch
        %249 = sbr.rel (%p246) target = $region44
      $region43: #{tpu_custom_call.1} parent=5 // pred_region
        %s250 = ssub.s32 %s16, 1
        // Predicated region
        $region45: #{tpu_custom_call.1} parent=43 // pred_check
          %p251 = pneg %p98
        $region46: #{tpu_custom_call.1} parent=43 // pred_check_branch
          %253 = sbr.rel (%p251) target = $region48
        $region47: #{tpu_custom_call.1} parent=43 // pred_region
          %254 = dma.done [#allocation3], 64
        $region48: #{tpu_custom_call.1} parent=43 // pred_fallthru
          _
        %s255 = smul.u32 2, %s26
        %p256 = scmp.lt.s32.totalorder %s25, 1
        %s257 = scalar_select %p256, %s25, 1
        %p258 = scmp.lt.s32.totalorder %s255, 1
        %s259 = scalar_select %p258, %s255, 1
        %s260 = smul.addr %s257, 2
        %s261 = sadd.s32 %s259, %s260
        %s262 = smul.addr %s261, 8
        %s263 = scalar_lea.vmem %s0, %s262
        %p264 = pneg %p56
        %p265 = pneg %p53
        %p266 = pneg %p77
        %p267 = pneg %p74
        %p268 = pneg %p98
        %p269 = pneg %p95
        %p270 = pneg %p119
        %p271 = pneg %p116
        %p272 = pneg %p140
        %p273 = pneg %p137
        %p274 = pneg %p161
        %p275 = pneg %p158
        %p276 = pneg %p189
        %p277 = pneg %p186
        %s278 = sand.u32 %s176, 1
        %s279 = scalar_lea.sflag [#allocation4], %s278
        %s280 = sand.u32 %s176, 1
        %s281 = smul.addr %s280, 16
        %s282 = scalar_lea.vmem [#allocation5], %s281
        %s283 = smul.u32 2, %s26
        %p284 = scmp.lt.s32.totalorder %s25, 1
        %s285 = scalar_select %p284, %s25, 1
        %p286 = scmp.lt.s32.totalorder %s283, 1
        %s287 = scalar_select %p286, %s283, 1
        %s288 = smul.addr %s285, 2
        %s289 = sadd.s32 %s287, %s288
        %s290 = smul.addr %s289, 8
        %s291 = scalar_lea.vmem %s0, %s290
        %s292 = smul.u32 2, %s26
        %s293 = smul.u32 2, %s26
        %v295 = vld [vmem:[%s291] sm:$0xff]
        %v296 = vld [vmem:[%s291 + $0x8] sm:$0xff]
        %v297 = vpack.c.bf16 %v295, %v295
        %v298 = vpack.c.bf16 %v296, %v296
        %v299 = vld [vmem:[%s5] sm:$0xff]
        %v300 = vld [vmem:[%s5 + $0x8] sm:$0xff]
        %v301 = vld [vmem:[%s5 + $0x10] sm:$0xff]
        %v302 = vld [vmem:[%s5 + $0x18] sm:$0xff]
        %v303 = vld [vmem:[%s1] sm:$0xf]
        %v304 = vld [vmem:[%s1 + $0x4] sm:$0xf]
        %v305 = vld [vmem:[%s1 + $0x8] sm:$0xf]
        %v306 = vld [vmem:[%s3] sm:$0xff]
        %v307 = vld [vmem:[%s3 + $0x8] sm:$0xff]
        %v308 = vld [vmem:[%s3 + $0x10] sm:$0xff]
        %310 = vset.pattern.permute.xlu0 0
        %311 = vperm.xlu0 %310, %v306
        %v312 = vpop.permute.xlu0 %311
        %315 = vset.pattern.permute.xlu0 0
        %316 = vperm.xlu0 %315, %v307
        %v317 = vpop.permute.xlu0 %316
        %320 = vset.pattern.permute.xlu0 0
        %321 = vperm.xlu0 %320, %v308
        %v322 = vpop.permute.xlu0 %321
        %v327 = vunpack.c.l.b16 %v303
        %v328 = vunpack.c.l.b16 %v304
        %v329 = vunpack.c.l.b16 %v305
        %v330 = vpack.c.b16 %v328, %v327
        %v331 = vpack.c.b16 %v329, %v329
        %vm332 = vcmask 64512
        %v334 = vsel %vm332, %v330, 0
        %v337 = vsel %vm332, %v331, 0
        %vm339 = vcmask 1043456
        %v341 = vsel %vm339, %v297, 0
        %v344 = vsel %vm339, %v298, 0
        %346 = vmatprep.subr.bf16.mxu0 %v344
        %347 = vmatpush1.bf16.msra.mxu0 %v341
        %348 = vmatprep.subr.bf16.mxu0 0
        %349 = vmatpush1.bf16.msra.mxu0 0
        %350 = vmatprep.subr.bf16.mxu0 0
        %351 = vmatpush1.bf16.msra.mxu0 0
        %352 = vmatprep.subr.bf16.mxu0 0
        %353 = vmatpush1.bf16.msra.mxu0 0
        %354 = vmatprep.subr.bf16.mxu0 0
        %355 = vmatpush1.bf16.msra.mxu0 0
        %356 = vmatprep.subr.bf16.mxu0 0
        %357 = vmatpush1.bf16.msra.mxu0 0
        %358 = vmatprep.subr.bf16.mxu0 0
        %359 = vmatpush1.bf16.msra.mxu0 0
        %360 = vmatprep.subr.bf16.mxu0 0
        %361 = vmatpush1.bf16.msra.mxu0 0
        %362 = vmatprep.subr.bf16.mxu0 0
        %363 = vmatpush1.bf16.msra.mxu0 0
        %364 = vmatprep.subr.bf16.mxu0 0
        %365 = vmatpush1.bf16.msra.mxu0 0
        %366 = vmatprep.subr.bf16.mxu0 0
        %367 = vmatpush1.bf16.msra.mxu0 0
        %368 = vmatprep.subr.bf16.mxu0 0
        %369 = vmatpush1.bf16.msra.mxu0 0
        %370 = vmatprep.subr.bf16.mxu0 0
        %371 = vmatpush1.bf16.msra.mxu0 0
        %372 = vmatprep.subr.bf16.mxu0 0
        %373 = vmatpush1.bf16.msra.mxu0 0
        %374 = vmatprep.subr.bf16.mxu0 0
        %375 = vmatpush1.bf16.msra.mxu0 0
        %376 = vmatprep.subr.bf16.mxu0 0
        %377 = vmatpush1.bf16.msra.mxu0 0
        %378 = vmatprep.mubr.bf16.mxu0 0
        %379 = vmatmul.mubr.bf16.gmra.mrb[0].mxu0 %v334
        %v380 = vpop.f32.mrb[0].mxu0
        %v381 = vadd.f32 %v312, %v380
        %v382 = vpop.f32.mrb[0].mxu0
        %v383 = vadd.f32 %v312, %v382
        %v384 = vpop.f32.mrb[0].mxu0
        %v385 = vadd.f32 %v317, %v384
        %v386 = vpop.f32.mrb[0].mxu0
        %v387 = vadd.f32 %v317, %v386
        %388 = vmatprep.mubr.bf16.mxu0 0
        %389 = vmatmul.mubr.bf16.gmra.mrb[0].mxu0 %v337
        %v390 = vpop.f32.mrb[0].mxu0
        %v391 = vadd.f32 %v322, %v390
        %v392 = vpop.f32.mrb[0].mxu0
        %v393 = vadd.f32 %v322, %v392
        %v394 = vpop.f32.mrb[0].mxu0
        %v395 = vpop.f32.mrb[0].mxu0
        %396 = vdwg.mxu0
        %vm397 = vcmp.gt.f32.partialorder %v299, 0.5
        %vm398 = vcmp.gt.f32.partialorder %v300, 0.5
        %vm399 = vcmp.gt.f32.partialorder %v301, 0.5
        %vm400 = vcmp.gt.f32.partialorder %v302, 0.5
        %v401 = vlaneseq
        %v402 = vshrl.u32 %v401, 7
        %v403 = vsub.s32 0, %v402
        %v404 = vrot.slane %v381, %v403
        %v405 = vlaneseq
        %v406 = vshrl.u32 %v405, 7
        %v407 = vsub.s32 0, %v406
        %v408 = vrot.slane %v383, %v407
        %v409 = vsel %vm397, %v404, -1e+30
        %v410 = vsel %vm398, %v408, -1e+30
        %v411 = vsel %vm399, %v404, -1e+30
        %v412 = vsel %vm400, %v408, -1e+30
        %v413 = vmax.f32 %v409, %v410
        %414 = vmax.xlane.f32.xlu0 %v413
        %v415 = vpop.xlane.xlu0 %414
        %v416 = vmax.f32 %v411, %v412
        %417 = vmax.xlane.f32.xlu0 %v416
        %v418 = vpop.xlane.xlu0 %417
        %v419 = vsub.f32 %v409, %v415
        %v420 = vsub.f32 %v410, %v415
        %v421 = vsub.f32 %v411, %v418
        %v422 = vsub.f32 %v412, %v418
        %v423 = vmul.f32 %v419, 1.442695
        %v424 = vpow.pop %v423
        %v425 = vmul.f32 %v420, 1.442695
        %v426 = vpow.pop %v425
        %v427 = vmul.f32 %v421, 1.442695
        %v428 = vpow.pop %v427
        %v429 = vmul.f32 %v422, 1.442695
        %v430 = vpow.pop %v429
        %v431 = vadd.f32 %v424, %v426
        %432 = vadd.xlane.f32.xlu0 %v431
        %v433 = vpop.xlane.xlu0 %432
        %v434 = vadd.f32 %v428, %v430
        %435 = vadd.xlane.f32.xlu0 %v434
        %v436 = vpop.xlane.xlu0 %435
        %v437 = vrcp.pop %v433
        %v438 = vrcp.pop %v436
        %v439 = vmul.f32 %v424, %v437
        %v440 = vmul.f32 %v426, %v437
        %v441 = vmul.f32 %v428, %v438
        %v442 = vmul.f32 %v430, %v438
        %v443 = vpack.c.bf16 %v385, %v385
        %v444 = vpack.c.bf16 %v387, %v387
        %v445 = vpack.c.bf16 %v441, %v439
        %v446 = vpack.c.bf16 %v442, %v440
        %447 = vmatprep.subr.bf16.mxu0 %v446
        %448 = vmatpush1.bf16.xpose.msra.mxu0 %v445
        %449 = vmatprep.subr.bf16.mxu0 0
        %450 = vmatpush1.bf16.xpose.msra.mxu0 0
        %451 = vmatprep.subr.bf16.mxu0 0
        %452 = vmatpush1.bf16.xpose.msra.mxu0 0
        %453 = vmatprep.subr.bf16.mxu0 0
        %454 = vmatpush1.bf16.xpose.msra.mxu0 0
        %455 = vmatprep.subr.bf16.mxu0 0
        %456 = vmatpush1.bf16.xpose.msra.mxu0 0
        %457 = vmatprep.subr.bf16.mxu0 0
        %458 = vmatpush1.bf16.xpose.msra.mxu0 0
        %459 = vmatprep.subr.bf16.mxu0 0
        %460 = vmatpush1.bf16.xpose.msra.mxu0 0
        %461 = vmatprep.subr.bf16.mxu0 0
        %462 = vmatpush1.bf16.xpose.msra.mxu0 0
        %463 = vmatprep.subr.bf16.mxu0 0
        %464 = vmatpush1.bf16.xpose.msra.mxu0 0
        %465 = vmatprep.subr.bf16.mxu0 0
        %466 = vmatpush1.bf16.xpose.msra.mxu0 0
        %467 = vmatprep.subr.bf16.mxu0 0
        %468 = vmatpush1.bf16.xpose.msra.mxu0 0
        %469 = vmatprep.subr.bf16.mxu0 0
        %470 = vmatpush1.bf16.xpose.msra.mxu0 0
        %471 = vmatprep.subr.bf16.mxu0 0
        %472 = vmatpush1.bf16.xpose.msra.mxu0 0
        %473 = vmatprep.subr.bf16.mxu0 0
        %474 = vmatpush1.bf16.xpose.msra.mxu0 0
        %475 = vmatprep.subr.bf16.mxu0 0
        %476 = vmatpush1.bf16.xpose.msra.mxu0 0
        %477 = vmatprep.subr.bf16.mxu0 0
        %478 = vmatpush1.bf16.xpose.msra.mxu0 0
        %479 = vmatprep.mubr.bf16.mxu0 %v444
        %480 = vmatmul.mubr.bf16.gmra.mrb[0].mxu0 %v443
        %v481 = vpop.f32.mrb[0].mxu0
        %v482 = vadd.f32 0.0, %v481
        %v483 = vpop.f32.mrb[0].mxu0
        %v484 = vpop.f32.mrb[0].mxu0
        %v485 = vpop.f32.mrb[0].mxu0
        %486 = vdwg.mxu0
        %vm487 = vcmask 130048
        %v489 = vsel %vm487, %v482, 0
        %491 = vmatprep.subr.mxu0 %v300
        %492 = vmatpush1.msra.mxu0 %v299
        %493 = vmatprep.subr.mxu0 %v302
        %494 = vmatpush1.msra.mxu0 %v301
        %495 = vmatprep.subr.mxu0 0.0
        %496 = vmatpush1.msra.mxu0 0.0
        %497 = vmatprep.subr.mxu0 0.0
        %498 = vmatpush1.msra.mxu0 0.0
        %499 = vmatprep.subr.mxu0 0.0
        %500 = vmatpush1.msra.mxu0 0.0
        %501 = vmatprep.subr.mxu0 0.0
        %502 = vmatpush1.msra.mxu0 0.0
        %503 = vmatprep.subr.mxu0 0.0
        %504 = vmatpush1.msra.mxu0 0.0
        %505 = vmatprep.subr.mxu0 0.0
        %506 = vmatpush1.msra.mxu0 0.0
        %507 = vmatprep.subr.mxu0 0.0
        %508 = vmatpush1.msra.mxu0 0.0
        %509 = vmatprep.subr.mxu0 0.0
        %510 = vmatpush1.msra.mxu0 0.0
        %511 = vmatprep.subr.mxu0 0.0
        %512 = vmatpush1.msra.mxu0 0.0
        %513 = vmatprep.subr.mxu0 0.0
        %514 = vmatpush1.msra.mxu0 0.0
        %515 = vmatprep.subr.mxu0 0.0
        %516 = vmatpush1.msra.mxu0 0.0
        %517 = vmatprep.subr.mxu0 0.0
        %518 = vmatpush1.msra.mxu0 0.0
        %519 = vmatprep.subr.mxu0 0.0
        %520 = vmatpush1.msra.mxu0 0.0
        %521 = vmatprep.subr.mxu0 0.0
        %522 = vmatpush1.msra.mxu0 0.0
        %523 = vmatprep.subr.mxu0 0.0
        %524 = vmatpush1.msra.mxu0 0.0
        %525 = vmatprep.subr.mxu0 0.0
        %526 = vmatpush1.msra.mxu0 0.0
        %527 = vmatprep.subr.mxu0 0.0
        %528 = vmatpush1.msra.mxu0 0.0
        %529 = vmatprep.subr.mxu0 0.0
        %530 = vmatpush1.msra.mxu0 0.0
        %531 = vmatprep.subr.mxu0 0.0
        %532 = vmatpush1.msra.mxu0 0.0
        %533 = vmatprep.subr.mxu0 0.0
        %534 = vmatpush1.msra.mxu0 0.0
        %535 = vmatprep.subr.mxu0 0.0
        %536 = vmatpush1.msra.mxu0 0.0
        %537 = vmatprep.subr.mxu0 0.0
        %538 = vmatpush1.msra.mxu0 0.0
        %539 = vmatprep.subr.mxu0 0.0
        %540 = vmatpush1.msra.mxu0 0.0
        %541 = vmatprep.subr.mxu0 0.0
        %542 = vmatpush1.msra.mxu0 0.0
        %543 = vmatprep.subr.mxu0 0.0
        %544 = vmatpush1.msra.mxu0 0.0
        %545 = vmatprep.subr.mxu0 0.0
        %546 = vmatpush1.msra.mxu0 0.0
        %547 = vmatprep.subr.mxu0 0.0
        %548 = vmatpush1.msra.mxu0 0.0
        %549 = vmatprep.subr.mxu0 0.0
        %550 = vmatpush1.msra.mxu0 0.0
        %551 = vmatprep.subr.mxu0 0.0
        %552 = vmatpush1.msra.mxu0 0.0
        %553 = vmatprep.subr.mxu0 0.0
        %554 = vmatpush1.msra.mxu0 0.0
        %555 = vmatprep.mubr.f32.mxu0 0.0
        %556 = vmatmul.mubr.f32.gmra.mrb[0].mxu0 %v489
        %v557 = vpop.f32.mrb[0].mxu0
        %v558 = vadd.f32 0.0, %v557
        %v559 = vpop.f32.mrb[0].mxu0
        %v560 = vadd.f32 0.0, %v559
        %561 = vdwg.mxu0
        %v562 = vmax.f32 %v391, 0.0
        %v563 = vmax.f32 %v393, 0.0
        %v564 = vmul.f32 %v562, %v558
        %v565 = vmul.f32 %v563, %v560
        %v566 = vld [vmem:[#allocation2] sm:$0xf]
        %v567 = vpack.c.bf16 %v564, %v564
        %v568 = vpack.c.bf16 %v565, %v565
        %v569 = vld [vmem:[%s4] sm:$0xff]
        %571 = vset.pattern.permute.xlu0 0
        %572 = vperm.xlu0 %571, %v569
        %v573 = vpop.permute.xlu0 %572
        %v576 = vsel %vm332, %v566, 0
        %v579 = vsel %vm339, %v567, 0
        %v582 = vsel %vm339, %v568, 0
        %584 = vmatprep.subr.bf16.mxu0 %v582
        %585 = vmatpush1.bf16.msra.mxu0 %v579
        %586 = vmatprep.subr.bf16.mxu0 0
        %587 = vmatpush1.bf16.msra.mxu0 0
        %588 = vmatprep.subr.bf16.mxu0 0
        %589 = vmatpush1.bf16.msra.mxu0 0
        %590 = vmatprep.subr.bf16.mxu0 0
        %591 = vmatpush1.bf16.msra.mxu0 0
        %592 = vmatprep.subr.bf16.mxu0 0
        %593 = vmatpush1.bf16.msra.mxu0 0
        %594 = vmatprep.subr.bf16.mxu0 0
        %595 = vmatpush1.bf16.msra.mxu0 0
        %596 = vmatprep.subr.bf16.mxu0 0
        %597 = vmatpush1.bf16.msra.mxu0 0
        %598 = vmatprep.subr.bf16.mxu0 0
        %599 = vmatpush1.bf16.msra.mxu0 0
        %600 = vmatprep.subr.bf16.mxu0 0
        %601 = vmatpush1.bf16.msra.mxu0 0
        %602 = vmatprep.subr.bf16.mxu0 0
        %603 = vmatpush1.bf16.msra.mxu0 0
        %604 = vmatprep.subr.bf16.mxu0 0
        %605 = vmatpush1.bf16.msra.mxu0 0
        %606 = vmatprep.subr.bf16.mxu0 0
        %607 = vmatpush1.bf16.msra.mxu0 0
        %608 = vmatprep.subr.bf16.mxu0 0
        %609 = vmatpush1.bf16.msra.mxu0 0
        %610 = vmatprep.subr.bf16.mxu0 0
        %611 = vmatpush1.bf16.msra.mxu0 0
        %612 = vmatprep.subr.bf16.mxu0 0
        %613 = vmatpush1.bf16.msra.mxu0 0
        %614 = vmatprep.subr.bf16.mxu0 0
        %615 = vmatpush1.bf16.msra.mxu0 0
        %616 = vmatprep.mubr.bf16.mxu0 0
        %617 = vmatmul.mubr.bf16.gmra.mrb[0].mxu0 %v576
        %v618 = vpop.f32.mrb[0].mxu0
        %v619 = vadd.f32 %v573, %v618
        %v620 = vpop.f32.mrb[0].mxu0
        %v621 = vadd.f32 %v573, %v620
        %v622 = vpop.f32.mrb[0].mxu0
        %v623 = vpop.f32.mrb[0].mxu0
        %624 = vdwg.mxu0
        %625 = vst [vmem:[%s282] sm:$0xff] %v619
        %626 = vst [vmem:[%s282 + $0x8] sm:$0xff] %v621
        %s627 = sand.u32 %s176, 1
        %s628 = scalar_lea.sflag [#allocation4], %s627
        %s629 = sand.u32 %s176, 1
        %s630 = smul.addr %s629, 16
        %s631 = scalar_lea.vmem [#allocation5], %s630
        // Predicated region
        $region49: #{tpu_custom_call.1} parent=43 // pred_check
          %p632 = pneg %p186
        $region50: #{tpu_custom_call.1} parent=43 // pred_check_branch
          %634 = sbr.rel (%p632) target = $region52
        $region51: #{tpu_custom_call.1} parent=43 // pred_region
          %s635 = smul.u32 2, %s26
          %s637 = ssub.s32 256, 256
          %638 = vsyncadd %s628, %s637
          %s639 = smul.addr %s25, 2
          %s640 = sadd.s32 %s635, %s639
          %s641 = smul.addr %s640, 128
          %s642 = scalar_lea.hbm %s6, %s641
          %s644 = sshll.u32 %s631, 4
          %s645 = int_to_ptr.vmem [resolvable:$true] %s644
          %647 = dma.vmem_to_hbm [thread:$0]  %s645, 256, %s642, %s628
        $region52: #{tpu_custom_call.1} parent=43 // pred_fallthru
          _
      $region44: #{tpu_custom_call.1} parent=5 // pred_fallthru
        _
      %p648 = scmp.le.s32.totalorder 2, %s16
      // Predicated region
      $region53: #{tpu_custom_call.1} parent=5 // pred_check
        %p649 = pneg %p648
      $region54: #{tpu_custom_call.1} parent=5 // pred_check_branch
        %651 = sbr.rel (%p649) target = $region56
      $region55: #{tpu_custom_call.1} parent=5 // pred_region
        %s652 = ssub.s32 %s16, 2
        // Predicated region
        $region57: #{tpu_custom_call.1} parent=55 // pred_check
          %p653 = pneg %p192
        $region58: #{tpu_custom_call.1} parent=55 // pred_check_branch
          %655 = sbr.rel (%p653) target = $region60
        $region59: #{tpu_custom_call.1} parent=55 // pred_region
          %s656 = sand.u32 %s177, 1
          %s657 = scalar_lea.sflag [#allocation4], %s656
          %s658 = sand.u32 %s177, 1
          %s659 = smul.addr %s658, 16
          %s660 = scalar_lea.vmem [#allocation5], %s659
          %661 = dma.done %s657, 256
        $region60: #{tpu_custom_call.1} parent=55 // pred_fallthru
          _
      $region56: #{tpu_custom_call.1} parent=5 // pred_fallthru
        _
    $region6: #{tpu_custom_call.1} parent=1 // loop_footer
      %s20 = sadd.s32 1, %s16
    $region7: #{tpu_custom_call.1} parent=1 // loop_footer_branch
      %15 = sbr.rel target = $region3
    $region8: #{tpu_custom_call.1} parent=1 // loop_exit
      _
    %662 = vsyncpa [#allocation3], 1
    %s663 = scalar_lea.sflag [#allocation3], 1
    %664 = vsyncpa %s663, 1
    %665 = vsyncpa [#allocation4], 1
    %s666 = scalar_lea.sflag [#allocation4], 1
    %667 = vsyncpa %s666, 1

// kernel: tpu_custom_call.1
$region0: #{tpu_custom_call.1}
  #allocation0 [shape = 'u32[]', space=smem, size = 0x4, offset = 0x4, fixed_abs, tag = 'smem constant byte address 0x4 - core index']
  #allocation1 [shape = 'u32[144,128]{1,0:T(1,128)}', space=vmem, size = 0x12000, scoped, tag = 'internal scratch']
  %s0 = inlined_call_operand.vmem [shape: f32[2,8,256], index: 0, kind: input, shape index: {}]
  %s1 = inlined_call_operand.vmem [shape: bf16[24,8], index: 1, kind: input, shape index: {}]
  %s2 = inlined_call_operand.hbm [shape: bf16[8,8], index: 2, kind: input, shape index: {}]
  %s3 = inlined_call_operand.vmem [shape: f32[24,1], index: 3, kind: input, shape index: {}]
  %s4 = inlined_call_operand.vmem [shape: f32[8,1], index: 4, kind: input, shape index: {}]
  %s5 = inlined_call_operand.vmem [shape: f32[16,256], index: 5, kind: input, shape index: {}]
  %s6 = inlined_call_operand.hbm [shape: f32[2,8,256], index: 6, kind: output, shape index: {}]
  %s7 = sld [smem:[#allocation0]]
  $region61: #{tpu_custom_call.1} parent=0
    _
  %s9 = ssub.s32 1, %s7
  %s10 = scalar_select 0, %s9, %s7
  $region1: #{tpu_custom_call.1} parent=0
    #allocation2 [shape = 'u8[2048]{0}', space=vmem, size = 0x800, scoped, tag = 'input window, operand 2, single buffered']
    #allocation3 [shape = 's32[2]{0}', space=sflag, size = 0x8, scoped, tag = 'scoped memory for tpu_custom_call.1']
    #allocation4 [shape = 's32[2]{0}', space=sflag, size = 0x8, scoped, tag = 'scoped memory for tpu_custom_call.1']
    #allocation5 [shape = 'u8[16384]{0}', space=vmem, size = 0x4000, scoped, tag = 'output window, operand 0']
    %11 = vsyncpa [#allocation3], 0
    %12 = vsyncpa [#allocation4], 0
    %s13 = scalar_lea.sflag [#allocation4], 1
    %14 = vsyncpa %s13, 0
    loop: start=0, step=1, limit=4
    $region2: #{tpu_custom_call.1} parent=1 // loop_pre_header
      _
    $region3: #{tpu_custom_call.1} parent=1 // loop_header
      %s16 = sphi 0, %s20
      %p17 = scmp.ge.s32.totalorder %s16, 4
      %s23 = sphi 0, %s35
      %s24 = sphi 0, %s31
      %s25 = sphi 0, %s23
      %s26 = sphi 0, %s24
      %s27 = sphi 0, %s25
      %s28 = sphi 0, %s26
      %s40 = sphi 0, %s42
      %s43 = sphi 0, %s40
      %s44 = sphi 0, %s43
      %s60 = sphi 0, %s44
      %s64 = sphi 0, %s64
      %s66 = sphi 0, %s64
      %s67 = sphi 0, %s66
      %s81 = sphi 0, %s67
      %s85 = sphi 0, %s85
      %s87 = sphi 0, %s85
      %s88 = sphi 0, %s87
      %s102 = sphi 0, %s88
      %s106 = sphi 0, %s106
      %s108 = sphi 0, %s106
      %s109 = sphi 0, %s108
      %s123 = sphi 0, %s109
      %s127 = sphi 0, %s127
      %s129 = sphi 0, %s127
      %s130 = sphi 0, %s129
      %s144 = sphi 0, %s130
      %s148 = sphi 0, %s148
      %s150 = sphi 0, %s148
      %s151 = sphi 0, %s150
      %s165 = sphi 0, %s151
      %s173 = sphi 0, %s175
      %s176 = sphi 0, %s173
      %s177 = sphi 0, %s176
      %s193 = sphi 0, %s177
    $region4: #{tpu_custom_call.1} parent=1 // loop_header_branch
      %19 = sbr.rel (%p17) target = $region8
    $region5: #{tpu_custom_call.1} parent=1 // loop_body
      %s21 = ssub.s32 %s16, 1
      %s22 = ssub.s32 %s16, 2
      %s29 = sadd.s32 1, %s24
      %p30 = scmp.ge.s32.totalorder %s29, 1
      %s31 = scalar_select %p30, 0, %s29
      %s32 = sadd.s32 1, %s23
      %s33 = scalar_select %p30, %s32, %s23
      %p34 = scmp.ge.s32.totalorder %s33, 2
      %s35 = scalar_select %p34, 0, %s33
      %s36 = ssub.s32 %s23, %s35
      %s37 = ssub.s32 %s24, %s31
      %s38 = sor.u32 %s36, %s37
      %p39 = scmp.eq.s32.totalorder %s38, 0
      %s41 = sadd.s32 %s40, 1
      %s42 = scalar_select %p39, %s40, %s41
      %p45 = pneg %p39
      %p46 = scmp.eq.s32.totalorder %s16, 1
      %p47 = por %p45, %p46
      %p48 = scmp.ne.s32.totalorder %s40, %s43
      %p49 = scmp.eq.s32.totalorder %s16, 0
      %p50 = por %p48, %p49
      %p51 = scmp.ne.s32.totalorder %s40, %s43
      %p52 = scmp.eq.s32.totalorder %s21, 1
      %p53 = por %p51, %p52
      %p54 = scmp.ne.s32.totalorder %s43, %s44
      %p55 = scmp.eq.s32.totalorder %s21, 0
      %p56 = por %p54, %p55
      %p57 = scmp.ne.s32.totalorder %s43, %s44
      %p58 = scmp.eq.s32.totalorder %s22, 1
      %p59 = por %p57, %p58
      %p61 = scmp.ne.s32.totalorder %s44, %s60
      %p62 = scmp.eq.s32.totalorder %s22, 0
      %p63 = por %p61, %p62
      %s65 = sadd.s32 %s64, 1
      %p68 = scmp.eq.s32.totalorder %s16, 1
      %p69 = scmp.ne.s32.totalorder %s64, %s66
      %p70 = scmp.eq.s32.totalorder %s16, 0
      %p71 = por %p69, %p70
      %p72 = scmp.ne.s32.totalorder %s64, %s66
      %p73 = scmp.eq.s32.totalorder %s21, 1
      %p74 = por %p72, %p73
      %p75 = scmp.ne.s32.totalorder %s66, %s67
      %p76 = scmp.eq.s32.totalorder %s21, 0
      %p77 = por %p75, %p76
      %p78 = scmp.ne.s32.totalorder %s66, %s67
      %p79 = scmp.eq.s32.totalorder %s22, 1
      %p80 = por %p78, %p79
      %p82 = scmp.ne.s32.totalorder %s67, %s81
      %p83 = scmp.eq.s32.totalorder %s22, 0
      %p84 = por %p82, %p83
      %s86 = sadd.s32 %s85, 1
      %p89 = scmp.eq.s32.totalorder %s16, 1
      %p90 = scmp.ne.s32.totalorder %s85, %s87
      %p91 = scmp.eq.s32.totalorder %s16, 0
      %p92 = por %p90, %p91
      %p93 = scmp.ne.s32.totalorder %s85, %s87
      %p94 = scmp.eq.s32.totalorder %s21, 1
      %p95 = por %p93, %p94
      %p96 = scmp.ne.s32.totalorder %s87, %s88
      %p97 = scmp.eq.s32.totalorder %s21, 0
      %p98 = por %p96, %p97
      %p99 = scmp.ne.s32.totalorder %s87, %s88
      %p100 = scmp.eq.s32.totalorder %s22, 1
      %p101 = por %p99, %p100
      %p103 = scmp.ne.s32.totalorder %s88, %s102
      %p104 = scmp.eq.s32.totalorder %s22, 0
      %p105 = por %p103, %p104
      %s107 = sadd.s32 %s106, 1
      %p110 = scmp.eq.s32.totalorder %s16, 1
      %p111 = scmp.ne.s32.totalorder %s106, %s108
      %p112 = scmp.eq.s32.totalorder %s16, 0
      %p113 = por %p111, %p112
      %p114 = scmp.ne.s32.totalorder %s106, %s108
      %p115 = scmp.eq.s32.totalorder %s21, 1
      %p116 = por %p114, %p115
      %p117 = scmp.ne.s32.totalorder %s108, %s109
      %p118 = scmp.eq.s32.totalorder %s21, 0
      %p119 = por %p117, %p118
      %p120 = scmp.ne.s32.totalorder %s108, %s109
      %p121 = scmp.eq.s32.totalorder %s22, 1
      %p122 = por %p120, %p121
      %p124 = scmp.ne.s32.totalorder %s109, %s123
      %p125 = scmp.eq.s32.totalorder %s22, 0
      %p126 = por %p124, %p125
      %s128 = sadd.s32 %s127, 1
      %p131 = scmp.eq.s32.totalorder %s16, 1
      %p132 = scmp.ne.s32.totalorder %s127, %s129
      %p133 = scmp.eq.s32.totalorder %s16, 0
      %p134 = por %p132, %p133
      %p135 = scmp.ne.s32.totalorder %s127, %s129
      %p136 = scmp.eq.s32.totalorder %s21, 1
      %p137 = por %p135, %p136
      %p138 = scmp.ne.s32.totalorder %s129, %s130
      %p139 = scmp.eq.s32.totalorder %s21, 0
      %p140 = por %p138, %p139
      %p141 = scmp.ne.s32.totalorder %s129, %s130
      %p142 = scmp.eq.s32.totalorder %s22, 1
      %p143 = por %p141, %p142
      %p145 = scmp.ne.s32.totalorder %s130, %s144
      %p146 = scmp.eq.s32.totalorder %s22, 0
      %p147 = por %p145, %p146
      %s149 = sadd.s32 %s148, 1
      %p152 = scmp.eq.s32.totalorder %s16, 1
      %p153 = scmp.ne.s32.totalorder %s148, %s150
      %p154 = scmp.eq.s32.totalorder %s16, 0
      %p155 = por %p153, %p154
      %p156 = scmp.ne.s32.totalorder %s148, %s150
      %p157 = scmp.eq.s32.totalorder %s21, 1
      %p158 = por %p156, %p157
      %p159 = scmp.ne.s32.totalorder %s150, %s151
      %p160 = scmp.eq.s32.totalorder %s21, 0
      %p161 = por %p159, %p160
      %p162 = scmp.ne.s32.totalorder %s150, %s151
      %p163 = scmp.eq.s32.totalorder %s22, 1
      %p164 = por %p162, %p163
      %p166 = scmp.ne.s32.totalorder %s151, %s165
      %p167 = scmp.eq.s32.totalorder %s22, 0
      %p168 = por %p166, %p167
      %s169 = ssub.s32 %s23, %s35
      %s170 = ssub.s32 %s24, %s31
      %s171 = sor.u32 %s169, %s170
      %p172 = scmp.eq.s32.totalorder %s171, 0
      %s174 = sadd.s32 %s173, 1
      %s175 = scalar_select %p172, %s173, %s174
      %p178 = pneg %p172
      %p179 = scmp.eq.s32.totalorder %s16, 1
      %p180 = por %p178, %p179
      %p181 = scmp.ne.s32.totalorder %s173, %s176
      %p182 = scmp.eq.s32.totalorder %s16, 0
      %p183 = por %p181, %p182
      %p184 = scmp.ne.s32.totalorder %s173, %s176
      %p185 = scmp.eq.s32.totalorder %s21, 1
      %p186 = por %p184, %p185
      %p187 = scmp.ne.s32.totalorder %s176, %s177
      %p188 = scmp.eq.s32.totalorder %s21, 0
      %p189 = por %p187, %p188
      %p190 = scmp.ne.s32.totalorder %s176, %s177
      %p191 = scmp.eq.s32.totalorder %s22, 1
      %p192 = por %p190, %p191
      %p194 = scmp.ne.s32.totalorder %s177, %s193
      %p195 = scmp.eq.s32.totalorder %s22, 0
      %p196 = por %p194, %p195
      %p197 = scmp.le.s32.totalorder 1, %s16
      %p198 = scmp.lt.s32.totalorder %s16, 3
      %p199 = pnand %p197, %p198
      %p200 = pneg %p199
      // Predicated region
      $region9: #{tpu_custom_call.1} parent=5 // pred_check
        _
      $region10: #{tpu_custom_call.1} parent=5 // pred_check_branch
        %202 = sbr.rel (%p199) target = $region12
      $region11: #{tpu_custom_call.1} parent=5 // pred_region
        %s203 = ssub.s32 %s16, 1
        // Predicated region
        $region13: #{tpu_custom_call.1} parent=11 // pred_check
          %p204 = pneg %p77
        $region14: #{tpu_custom_call.1} parent=11 // pred_check_branch
          %206 = sbr.rel (%p204) target = $region16
        $region15: #{tpu_custom_call.1} parent=11 // pred_region
          _
        $region16: #{tpu_custom_call.1} parent=11 // pred_fallthru
          _
        // Predicated region
        $region17: #{tpu_custom_call.1} parent=11 // pred_check
          %p207 = pneg %p98
        $region18: #{tpu_custom_call.1} parent=11 // pred_check_branch
          %209 = sbr.rel (%p207) target = $region20
        $region19: #{tpu_custom_call.1} parent=11 // pred_region
          %s211 = ssub.s32 64, 64
          %212 = vsyncadd [#allocation3], %s211
          %s214 = sshll.u32 [#allocation2], 4
          %s215 = int_to_ptr.vmem [resolvable:$true] %s214
          %217 = dma.hbm_to_vmem [thread:$0]  %s2, 64, %s215, [#allocation3]
        $region20: #{tpu_custom_call.1} parent=11 // pred_fallthru
          _
        // Predicated region
        $region21: #{tpu_custom_call.1} parent=11 // pred_check
          %p218 = pneg %p119
        $region22: #{tpu_custom_call.1} parent=11 // pred_check_branch
          %220 = sbr.rel (%p218) target = $region24
        $region23: #{tpu_custom_call.1} parent=11 // pred_region
          _
        $region24: #{tpu_custom_call.1} parent=11 // pred_fallthru
          _
        // Predicated region
        $region25: #{tpu_custom_call.1} parent=11 // pred_check
          %p221 = pneg %p140
        $region26: #{tpu_custom_call.1} parent=11 // pred_check_branch
          %223 = sbr.rel (%p221) target = $region28
        $region27: #{tpu_custom_call.1} parent=11 // pred_region
          _
        $region28: #{tpu_custom_call.1} parent=11 // pred_fallthru
          _
        // Predicated region
        $region29: #{tpu_custom_call.1} parent=11 // pred_check
          %p224 = pneg %p161
        $region30: #{tpu_custom_call.1} parent=11 // pred_check_branch
          %226 = sbr.rel (%p224) target = $region32
        $region31: #{tpu_custom_call.1} parent=11 // pred_region
          _
        $region32: #{tpu_custom_call.1} parent=11 // pred_fallthru
          _
      $region12: #{tpu_custom_call.1} parent=5 // pred_fallthru
        _
      %p227 = scmp.lt.s32.totalorder %s16, 2
      // Predicated region
      $region33: #{tpu_custom_call.1} parent=5 // pred_check
        %p228 = pneg %p227
      $region34: #{tpu_custom_call.1} parent=5 // pred_check_branch
        %230 = sbr.rel (%p228) target = $region36
      $region35: #{tpu_custom_call.1} parent=5 // pred_region
        // Predicated region
        $region37: #{tpu_custom_call.1} parent=35 // pred_check
          %p231 = pneg %p50
        $region38: #{tpu_custom_call.1} parent=35 // pred_check_branch
          %233 = sbr.rel (%p231) target = $region40
        $region39: #{tpu_custom_call.1} parent=35 // pred_region
          %s234 = smul.u32 2, %s24
          %p235 = scmp.lt.s32.totalorder %s23, 1
          %s236 = scalar_select %p235, %s23, 1
          %p237 = scmp.lt.s32.totalorder %s234, 1
          %s238 = scalar_select %p237, %s234, 1
          %s239 = smul.addr %s236, 2
          %s240 = sadd.s32 %s238, %s239
          %s241 = smul.addr %s240, 8
          %s242 = scalar_lea.vmem %s0, %s241
          %s243 = smul.u32 2, %s24
        $region40: #{tpu_custom_call.1} parent=35 // pred_fallthru
          _
      $region36: #{tpu_custom_call.1} parent=5 // pred_fallthru
        _
      %p244 = scmp.le.s32.totalorder 1, %s16
      %p245 = scmp.lt.s32.totalorder %s16, 3
      %p246 = pnand %p244, %p245
      %p247 = pneg %p246
      // Predicated region
      $region41: #{tpu_custom_call.1} parent=5 // pred_check
        _
      $region42: #{tpu_custom_call.1} parent=5 // pred_check_branch
        %249 = sbr.rel (%p246) target = $region44
      $region43: #{tpu_custom_call.1} parent=5 // pred_region
        %s250 = ssub.s32 %s16, 1
        // Predicated region
        $region45: #{tpu_custom_call.1} parent=43 // pred_check
          %p251 = pneg %p98
        $region46: #{tpu_custom_call.1} parent=43 // pred_check_branch
          %253 = sbr.rel (%p251) target = $region48
        $region47: #{tpu_custom_call.1} parent=43 // pred_region
          %254 = dma.done [#allocation3], 64
        $region48: #{tpu_custom_call.1} parent=43 // pred_fallthru
          _
        %s255 = smul.u32 2, %s26
        %p256 = scmp.lt.s32.totalorder %s25, 1
        %s257 = scalar_select %p256, %s25, 1
        %p258 = scmp.lt.s32.totalorder %s255, 1
        %s259 = scalar_select %p258, %s255, 1
        %s260 = smul.addr %s257, 2
        %s261 = sadd.s32 %s259, %s260
        %s262 = smul.addr %s261, 8
        %s263 = scalar_lea.vmem %s0, %s262
        %p264 = pneg %p56
        %p265 = pneg %p53
        %p266 = pneg %p77
        %p267 = pneg %p74
        %p268 = pneg %p98
        %p269 = pneg %p95
        %p270 = pneg %p119
        %p271 = pneg %p116
        %p272 = pneg %p140
        %p273 = pneg %p137
        %p274 = pneg %p161
        %p275 = pneg %p158
        %p276 = pneg %p189
        %p277 = pneg %p186
        %s278 = sand.u32 %s176, 1
        %s279 = scalar_lea.sflag [#allocation4], %s278
        %s280 = sand.u32 %s176, 1
        %s281 = smul.addr %s280, 16
        %s282 = scalar_lea.vmem [#allocation5], %s281
        %s283 = smul.u32 2, %s26
        %p284 = scmp.lt.s32.totalorder %s25, 1
        %s285 = scalar_select %p284, %s25, 1
        %p286 = scmp.lt.s32.totalorder %s283, 1
        %s287 = scalar_select %p286, %s283, 1
        %s288 = smul.addr %s285, 2
        %s289 = sadd.s32 %s287, %s288
        %s290 = smul.addr %s289, 8
        %s291 = scalar_lea.vmem %s0, %s290
        %s292 = smul.u32 2, %s26
        %s293 = smul.u32 2, %s26
        %v295 = vld [vmem:[%s291] sm:$0xff]
        %v296 = vld [vmem:[%s291 + $0x8] sm:$0xff]
        %v297 = vpack.c.bf16 %v295, %v295
        %v298 = vpack.c.bf16 %v296, %v296
        %v299 = vld [vmem:[%s5] sm:$0xff]
        %v300 = vld [vmem:[%s5 + $0x8] sm:$0xff]
        %v301 = vld [vmem:[%s5 + $0x10] sm:$0xff]
        %v302 = vld [vmem:[%s5 + $0x18] sm:$0xff]
        %v303 = vld [vmem:[%s1] sm:$0xf]
        %v304 = vld [vmem:[%s1 + $0x4] sm:$0xf]
        %v305 = vld [vmem:[%s1 + $0x8] sm:$0xf]
        %v306 = vld [vmem:[%s3] sm:$0xff]
        %v307 = vld [vmem:[%s3 + $0x8] sm:$0xff]
        %v308 = vld [vmem:[%s3 + $0x10] sm:$0xff]
        %310 = vset.pattern.permute.xlu0 0
        %311 = vperm.xlu0 %310, %v306
        %v312 = vpop.permute.xlu0 %311
        %315 = vset.pattern.permute.xlu0 0
        %316 = vperm.xlu0 %315, %v307
        %v317 = vpop.permute.xlu0 %316
        %320 = vset.pattern.permute.xlu0 0
        %321 = vperm.xlu0 %320, %v308
        %v322 = vpop.permute.xlu0 %321
        %v327 = vunpack.c.l.b16 %v303
        %v328 = vunpack.c.l.b16 %v304
        %v329 = vunpack.c.l.b16 %v305
        %v330 = vpack.c.b16 %v328, %v327
        %v331 = vpack.c.b16 %v329, %v329
        %vm332 = vcmask 64512
        %v334 = vsel %vm332, %v330, 0
        %v337 = vsel %vm332, %v331, 0
        %vm339 = vcmask 1043456
        %v341 = vsel %vm339, %v297, 0
        %v344 = vsel %vm339, %v298, 0
        %346 = vmatprep.subr.bf16.mxu0 %v344
        %347 = vmatpush1.bf16.msra.mxu0 %v341
        %348 = vmatprep.subr.bf16.mxu0 0
        %349 = vmatpush1.bf16.msra.mxu0 0
        %350 = vmatprep.subr.bf16.mxu0 0
        %351 = vmatpush1.bf16.msra.mxu0 0
        %352 = vmatprep.subr.bf16.mxu0 0
        %353 = vmatpush1.bf16.msra.mxu0 0
        %354 = vmatprep.subr.bf16.mxu0 0
        %355 = vmatpush1.bf16.msra.mxu0 0
        %356 = vmatprep.subr.bf16.mxu0 0
        %357 = vmatpush1.bf16.msra.mxu0 0
        %358 = vmatprep.subr.bf16.mxu0 0
        %359 = vmatpush1.bf16.msra.mxu0 0
        %360 = vmatprep.subr.bf16.mxu0 0
        %361 = vmatpush1.bf16.msra.mxu0 0
        %362 = vmatprep.subr.bf16.mxu0 0
        %363 = vmatpush1.bf16.msra.mxu0 0
        %364 = vmatprep.subr.bf16.mxu0 0
        %365 = vmatpush1.bf16.msra.mxu0 0
        %366 = vmatprep.subr.bf16.mxu0 0
        %367 = vmatpush1.bf16.msra.mxu0 0
        %368 = vmatprep.subr.bf16.mxu0 0
        %369 = vmatpush1.bf16.msra.mxu0 0
        %370 = vmatprep.subr.bf16.mxu0 0
        %371 = vmatpush1.bf16.msra.mxu0 0
        %372 = vmatprep.subr.bf16.mxu0 0
        %373 = vmatpush1.bf16.msra.mxu0 0
        %374 = vmatprep.subr.bf16.mxu0 0
        %375 = vmatpush1.bf16.msra.mxu0 0
        %376 = vmatprep.subr.bf16.mxu0 0
        %377 = vmatpush1.bf16.msra.mxu0 0
        %378 = vmatprep.mubr.bf16.mxu0 0
        %379 = vmatmul.mubr.bf16.gmra.mrb[0].mxu0 %v334
        %v380 = vpop.f32.mrb[0].mxu0
        %v381 = vadd.f32 %v312, %v380
        %v382 = vpop.f32.mrb[0].mxu0
        %v383 = vadd.f32 %v312, %v382
        %v384 = vpop.f32.mrb[0].mxu0
        %v385 = vadd.f32 %v317, %v384
        %v386 = vpop.f32.mrb[0].mxu0
        %v387 = vadd.f32 %v317, %v386
        %388 = vmatprep.mubr.bf16.mxu0 0
        %389 = vmatmul.mubr.bf16.gmra.mrb[0].mxu0 %v337
        %v390 = vpop.f32.mrb[0].mxu0
        %v391 = vadd.f32 %v322, %v390
        %v392 = vpop.f32.mrb[0].mxu0
        %v393 = vadd.f32 %v322, %v392
        %v394 = vpop.f32.mrb[0].mxu0
        %v395 = vpop.f32.mrb[0].mxu0
        %396 = vdwg.mxu0
        %vm397 = vcmp.gt.f32.partialorder %v299, 0.5
        %vm398 = vcmp.gt.f32.partialorder %v300, 0.5
        %vm399 = vcmp.gt.f32.partialorder %v301, 0.5
        %vm400 = vcmp.gt.f32.partialorder %v302, 0.5
        %v401 = vlaneseq
        %v402 = vshrl.u32 %v401, 7
        %v403 = vsub.s32 0, %v402
        %v404 = vrot.slane %v381, %v403
        %v405 = vlaneseq
        %v406 = vshrl.u32 %v405, 7
        %v407 = vsub.s32 0, %v406
        %v408 = vrot.slane %v383, %v407
        %v409 = vsel %vm397, %v404, -1e+30
        %v410 = vsel %vm398, %v408, -1e+30
        %v411 = vsel %vm399, %v404, -1e+30
        %v412 = vsel %vm400, %v408, -1e+30
        %v413 = vmax.f32 %v409, %v410
        %414 = vmax.xlane.f32.xlu0 %v413
        %v415 = vpop.xlane.xlu0 %414
        %v416 = vmax.f32 %v411, %v412
        %417 = vmax.xlane.f32.xlu0 %v416
        %v418 = vpop.xlane.xlu0 %417
        %v419 = vsub.f32 %v409, %v415
        %v420 = vsub.f32 %v410, %v415
        %v421 = vsub.f32 %v411, %v418
        %v422 = vsub.f32 %v412, %v418
        %v423 = vmul.f32 %v419, 1.442695
        %v424 = vpow.pop %v423
        %v425 = vmul.f32 %v420, 1.442695
        %v426 = vpow.pop %v425
        %v427 = vmul.f32 %v421, 1.442695
        %v428 = vpow.pop %v427
        %v429 = vmul.f32 %v422, 1.442695
        %v430 = vpow.pop %v429
        %v431 = vadd.f32 %v424, %v426
        %432 = vadd.xlane.f32.xlu0 %v431
        %v433 = vpop.xlane.xlu0 %432
        %v434 = vadd.f32 %v428, %v430
        %435 = vadd.xlane.f32.xlu0 %v434
        %v436 = vpop.xlane.xlu0 %435
        %v437 = vrcp.pop %v433
        %v438 = vrcp.pop %v436
        %v439 = vmul.f32 %v424, %v437
        %v440 = vmul.f32 %v426, %v437
        %v441 = vmul.f32 %v428, %v438
        %v442 = vmul.f32 %v430, %v438
        %v443 = vpack.c.bf16 %v385, %v385
        %v444 = vpack.c.bf16 %v387, %v387
        %v445 = vpack.c.bf16 %v441, %v439
        %v446 = vpack.c.bf16 %v442, %v440
        %447 = vmatprep.subr.bf16.mxu0 %v446
        %448 = vmatpush1.bf16.xpose.msra.mxu0 %v445
        %449 = vmatprep.subr.bf16.mxu0 0
        %450 = vmatpush1.bf16.xpose.msra.mxu0 0
        %451 = vmatprep.subr.bf16.mxu0 0
        %452 = vmatpush1.bf16.xpose.msra.mxu0 0
        %453 = vmatprep.subr.bf16.mxu0 0
        %454 = vmatpush1.bf16.xpose.msra.mxu0 0
        %455 = vmatprep.subr.bf16.mxu0 0
        %456 = vmatpush1.bf16.xpose.msra.mxu0 0
        %457 = vmatprep.subr.bf16.mxu0 0
        %458 = vmatpush1.bf16.xpose.msra.mxu0 0
        %459 = vmatprep.subr.bf16.mxu0 0
        %460 = vmatpush1.bf16.xpose.msra.mxu0 0
        %461 = vmatprep.subr.bf16.mxu0 0
        %462 = vmatpush1.bf16.xpose.msra.mxu0 0
        %463 = vmatprep.subr.bf16.mxu0 0
        %464 = vmatpush1.bf16.xpose.msra.mxu0 0
        %465 = vmatprep.subr.bf16.mxu0 0
        %466 = vmatpush1.bf16.xpose.msra.mxu0 0
        %467 = vmatprep.subr.bf16.mxu0 0
        %468 = vmatpush1.bf16.xpose.msra.mxu0 0
        %469 = vmatprep.subr.bf16.mxu0 0
        %470 = vmatpush1.bf16.xpose.msra.mxu0 0
        %471 = vmatprep.subr.bf16.mxu0 0
        %472 = vmatpush1.bf16.xpose.msra.mxu0 0
        %473 = vmatprep.subr.bf16.mxu0 0
        %474 = vmatpush1.bf16.xpose.msra.mxu0 0
        %475 = vmatprep.subr.bf16.mxu0 0
        %476 = vmatpush1.bf16.xpose.msra.mxu0 0
        %477 = vmatprep.subr.bf16.mxu0 0
        %478 = vmatpush1.bf16.xpose.msra.mxu0 0
        %479 = vmatprep.mubr.bf16.mxu0 %v444
        %480 = vmatmul.mubr.bf16.gmra.mrb[0].mxu0 %v443
        %v481 = vpop.f32.mrb[0].mxu0
        %v482 = vadd.f32 0.0, %v481
        %v483 = vpop.f32.mrb[0].mxu0
        %v484 = vpop.f32.mrb[0].mxu0
        %v485 = vpop.f32.mrb[0].mxu0
        %486 = vdwg.mxu0
        %vm487 = vcmask 130048
        %v489 = vsel %vm487, %v482, 0
        %491 = vmatprep.subr.mxu0 %v300
        %492 = vmatpush1.msra.mxu0 %v299
        %493 = vmatprep.subr.mxu0 %v302
        %494 = vmatpush1.msra.mxu0 %v301
        %495 = vmatprep.subr.mxu0 0.0
        %496 = vmatpush1.msra.mxu0 0.0
        %497 = vmatprep.subr.mxu0 0.0
        %498 = vmatpush1.msra.mxu0 0.0
        %499 = vmatprep.subr.mxu0 0.0
        %500 = vmatpush1.msra.mxu0 0.0
        %501 = vmatprep.subr.mxu0 0.0
        %502 = vmatpush1.msra.mxu0 0.0
        %503 = vmatprep.subr.mxu0 0.0
        %504 = vmatpush1.msra.mxu0 0.0
        %505 = vmatprep.subr.mxu0 0.0
        %506 = vmatpush1.msra.mxu0 0.0
        %507 = vmatprep.subr.mxu0 0.0
        %508 = vmatpush1.msra.mxu0 0.0
        %509 = vmatprep.subr.mxu0 0.0
        %510 = vmatpush1.msra.mxu0 0.0
        %511 = vmatprep.subr.mxu0 0.0
        %512 = vmatpush1.msra.mxu0 0.0
        %513 = vmatprep.subr.mxu0 0.0
        %514 = vmatpush1.msra.mxu0 0.0
        %515 = vmatprep.subr.mxu0 0.0
        %516 = vmatpush1.msra.mxu0 0.0
        %517 = vmatprep.subr.mxu0 0.0
        %518 = vmatpush1.msra.mxu0 0.0
        %519 = vmatprep.subr.mxu0 0.0
        %520 = vmatpush1.msra.mxu0 0.0
        %521 = vmatprep.subr.mxu0 0.0
        %522 = vmatpush1.msra.mxu0 0.0
        %523 = vmatprep.subr.mxu0 0.0
        %524 = vmatpush1.msra.mxu0 0.0
        %525 = vmatprep.subr.mxu0 0.0
        %526 = vmatpush1.msra.mxu0 0.0
        %527 = vmatprep.subr.mxu0 0.0
        %528 = vmatpush1.msra.mxu0 0.0
        %529 = vmatprep.subr.mxu0 0.0
        %530 = vmatpush1.msra.mxu0 0.0
        %531 = vmatprep.subr.mxu0 0.0
        %532 = vmatpush1.msra.mxu0 0.0
        %533 = vmatprep.subr.mxu0 0.0
        %534 = vmatpush1.msra.mxu0 0.0
        %535 = vmatprep.subr.mxu0 0.0
        %536 = vmatpush1.msra.mxu0 0.0
        %537 = vmatprep.subr.mxu0 0.0
        %538 = vmatpush1.msra.mxu0 0.0
        %539 = vmatprep.subr.mxu0 0.0
        %540 = vmatpush1.msra.mxu0 0.0
        %541 = vmatprep.subr.mxu0 0.0
        %542 = vmatpush1.msra.mxu0 0.0
        %543 = vmatprep.subr.mxu0 0.0
        %544 = vmatpush1.msra.mxu0 0.0
        %545 = vmatprep.subr.mxu0 0.0
        %546 = vmatpush1.msra.mxu0 0.0
        %547 = vmatprep.subr.mxu0 0.0
        %548 = vmatpush1.msra.mxu0 0.0
        %549 = vmatprep.subr.mxu0 0.0
        %550 = vmatpush1.msra.mxu0 0.0
        %551 = vmatprep.subr.mxu0 0.0
        %552 = vmatpush1.msra.mxu0 0.0
        %553 = vmatprep.subr.mxu0 0.0
        %554 = vmatpush1.msra.mxu0 0.0
        %555 = vmatprep.mubr.f32.mxu0 0.0
        %556 = vmatmul.mubr.f32.gmra.mrb[0].mxu0 %v489
        %v557 = vpop.f32.mrb[0].mxu0
        %v558 = vadd.f32 0.0, %v557
        %v559 = vpop.f32.mrb[0].mxu0
        %v560 = vadd.f32 0.0, %v559
        %561 = vdwg.mxu0
        %v562 = vmax.f32 %v391, 0.0
        %v563 = vmax.f32 %v393, 0.0
        %v564 = vmul.f32 %v562, %v558
        %v565 = vmul.f32 %v563, %v560
        %v566 = vld [vmem:[#allocation2] sm:$0xf]
        %v567 = vpack.c.bf16 %v564, %v564
        %v568 = vpack.c.bf16 %v565, %v565
        %v569 = vld [vmem:[%s4] sm:$0xff]
        %571 = vset.pattern.permute.xlu0 0
        %572 = vperm.xlu0 %571, %v569
        %v573 = vpop.permute.xlu0 %572
        %v576 = vsel %vm332, %v566, 0
        %v579 = vsel %vm339, %v567, 0
        %v582 = vsel %vm339, %v568, 0
        %584 = vmatprep.subr.bf16.mxu0 %v582
        %585 = vmatpush1.bf16.msra.mxu0 %v579
        %586 = vmatprep.subr.bf16.mxu0 0
        %587 = vmatpush1.bf16.msra.mxu0 0
        %588 = vmatprep.subr.bf16.mxu0 0
        %589 = vmatpush1.bf16.msra.mxu0 0
        %590 = vmatprep.subr.bf16.mxu0 0
        %591 = vmatpush1.bf16.msra.mxu0 0
        %592 = vmatprep.subr.bf16.mxu0 0
        %593 = vmatpush1.bf16.msra.mxu0 0
        %594 = vmatprep.subr.bf16.mxu0 0
        %595 = vmatpush1.bf16.msra.mxu0 0
        %596 = vmatprep.subr.bf16.mxu0 0
        %597 = vmatpush1.bf16.msra.mxu0 0
        %598 = vmatprep.subr.bf16.mxu0 0
        %599 = vmatpush1.bf16.msra.mxu0 0
        %600 = vmatprep.subr.bf16.mxu0 0
        %601 = vmatpush1.bf16.msra.mxu0 0
        %602 = vmatprep.subr.bf16.mxu0 0
        %603 = vmatpush1.bf16.msra.mxu0 0
        %604 = vmatprep.subr.bf16.mxu0 0
        %605 = vmatpush1.bf16.msra.mxu0 0
        %606 = vmatprep.subr.bf16.mxu0 0
        %607 = vmatpush1.bf16.msra.mxu0 0
        %608 = vmatprep.subr.bf16.mxu0 0
        %609 = vmatpush1.bf16.msra.mxu0 0
        %610 = vmatprep.subr.bf16.mxu0 0
        %611 = vmatpush1.bf16.msra.mxu0 0
        %612 = vmatprep.subr.bf16.mxu0 0
        %613 = vmatpush1.bf16.msra.mxu0 0
        %614 = vmatprep.subr.bf16.mxu0 0
        %615 = vmatpush1.bf16.msra.mxu0 0
        %616 = vmatprep.mubr.bf16.mxu0 0
        %617 = vmatmul.mubr.bf16.gmra.mrb[0].mxu0 %v576
        %v618 = vpop.f32.mrb[0].mxu0
        %v619 = vadd.f32 %v573, %v618
        %v620 = vpop.f32.mrb[0].mxu0
        %v621 = vadd.f32 %v573, %v620
        %v622 = vpop.f32.mrb[0].mxu0
        %v623 = vpop.f32.mrb[0].mxu0
        %624 = vdwg.mxu0
        %625 = vst [vmem:[%s282] sm:$0xff] %v619
        %626 = vst [vmem:[%s282 + $0x8] sm:$0xff] %v621
        %s627 = sand.u32 %s176, 1
        %s628 = scalar_lea.sflag [#allocation4], %s627
        %s629 = sand.u32 %s176, 1
        %s630 = smul.addr %s629, 16
        %s631 = scalar_lea.vmem [#allocation5], %s630
        // Predicated region
        $region49: #{tpu_custom_call.1} parent=43 // pred_check
          %p632 = pneg %p186
        $region50: #{tpu_custom_call.1} parent=43 // pred_check_branch
          %634 = sbr.rel (%p632) target = $region52
        $region51: #{tpu_custom_call.1} parent=43 // pred_region
          %s635 = smul.u32 2, %s26
          %s637 = ssub.s32 256, 256
          %638 = vsyncadd %s628, %s637
          %s639 = smul.addr %s25, 2
          %s640 = sadd.s32 %s635, %s639
          %s641 = smul.addr %s640, 128
          %s642 = scalar_lea.hbm %s6, %s641
          %s644 = sshll.u32 %s631, 4
          %s645 = int_to_ptr.vmem [resolvable:$true] %s644
          %647 = dma.vmem_to_hbm [thread:$0]  %s645, 256, %s642, %s628
        $region52: #{tpu_custom_call.1} parent=43 // pred_fallthru
          _
      $region44: #{tpu_custom_call.1} parent=5 // pred_fallthru
        _
      %p648 = scmp.le.s32.totalorder 2, %s16
      // Predicated region
      $region53: #{tpu_custom_call.1} parent=5 // pred_check
        %p649 = pneg %p648
      $region54: #{tpu_custom_call.1} parent=5 // pred_check_branch
        %651 = sbr.rel (%p649) target = $region56
      $region55: #{tpu_custom_call.1} parent=5 // pred_region
        %s652 = ssub.s32 %s16, 2
        // Predicated region
        $region57: #{tpu_custom_call.1} parent=55 // pred_check
          %p653 = pneg %p192
        $region58: #{tpu_custom_call.1} parent=55 // pred_check_branch
          %655 = sbr.rel (%p653) target = $region60
        $region59: #{tpu_custom_call.1} parent=55 // pred_region
          %s656 = sand.u32 %s177, 1
          %s657 = scalar_lea.sflag [#allocation4], %s656
          %s658 = sand.u32 %s177, 1
          %s659 = smul.addr %s658, 16
          %s660 = scalar_lea.vmem [#allocation5], %s659
          %661 = dma.done %s657, 256
        $region60: #{tpu_custom_call.1} parent=55 // pred_fallthru
          _
      $region56: #{tpu_custom_call.1} parent=5 // pred_fallthru
        _
    $region6: #{tpu_custom_call.1} parent=1 // loop_footer
      %s20 = sadd.s32 1, %s16
    $region7: #{tpu_custom_call.1} parent=1 // loop_footer_branch
      %15 = sbr.rel target = $region3
    $region8: #{tpu_custom_call.1} parent=1 // loop_exit
      _
    %662 = vsyncpa [#allocation3], 1
    %s663 = scalar_lea.sflag [#allocation3], 1
    %664 = vsyncpa %s663, 1
    %665 = vsyncpa [#allocation4], 1
    %s666 = scalar_lea.sflag [#allocation4], 1
    %667 = vsyncpa %s666, 1

</llo_original>
